<compile_context>
chip_gen: v5e
topology: v5e:2x2
jax: 0.10.0
libtpu: 0.0.40
codegen_flags: <defaults>
</compile_context>

<pallas_src>
import numpy as np
import jax
import jax.numpy as jnp
from jax.experimental import pallas as pl
from jax.experimental.pallas import tpu as pltpu

SELU_ALPHA = 1.6732632423543772848170429916717
SELU_SCALE = 1.0507009873554804934193349852946


def _round_up(x, m):
    return ((x + m - 1) // m) * m


# ---------------------------------------------------------------------------
# Packed layout (shared by pack_params and the kernel)
# ---------------------------------------------------------------------------
def _layout(cfg):
    V_e, V_p = cfg["EHR_vocab"], cfg["PRS_vocab"]
    S_e, S_p = cfg["S_ehr"], cfg["S_prs"]
    E_e = cfg["ehr_emb"]
    K = cfg["kernel_size"]
    assert K % 2 == 1, "only odd kernel_size gives 'same' conv/pool lengths"
    assert E_e % 2 == 0
    p = (K - 1) // 2
    C = E_e // 2
    SC = S_e * C              # conv/pool feature width, columns (s-outer, c-inner)
    SV_e = S_e * V_e          # EHR (position, token) one-hot width
    SV_p = S_p * V_p          # PRS (position, token) one-hot width
    VS_e = V_e * S_e          # linear8 output width
    VS_p = V_p * S_p          # linear13 output width
    dlist = [d for d in range(-p, p + 1) if d != 0]

    # f32 constant slab rows: [Re; Rp; vpat_e; vpat_p; pool masks; conv bias; biases]
    CW = max(SV_e, SV_p, SC, VS_e, VS_p, 64)
    const_rows, off = {}, 0

    def _add(name, n):
        nonlocal off
        const_rows[name] = off
        off += n

    _add("Re", S_e)
    _add("Rp", S_p)
    _add("vpat_e", 1)
    _add("vpat_p", 1)
    _add("pmask", len(dlist))
    _add("cbias", 1)
    for b in ("b1", "b3", "b7", "b8", "b9", "b10", "b11", "b13", "b15", "b16"):
        _add(b, 1)
    const_nrows = off

    # bf16 small-weight slab (width 64)
    sm_shapes = {"w1": (SC, 64), "w3": (64, 32), "w7": (32, 64),
                 "w9f": (SV_p, 64), "w10": (64, 32), "w11": (32, 64),
                 "w15": (32, 32), "w16": (32, 16)}
    sm_order = ("w1", "w3", "w7", "w9f", "w10", "w11", "w15", "w16")
    sm_off, soff = {}, 0
    for n in sm_order:
        sm_off[n] = soff
        soff += sm_shapes[n][0]

    WW = _round_up(max(VS_e, VS_p), 128)        # wide (decoder) slab width
    OUTW = _round_up(max(VS_e, VS_p, 16), 128)  # merged output slab width

    return dict(V_e=V_e, V_p=V_p, S_e=S_e, S_p=S_p, E_e=E_e, K=K, p=p, C=C,
                SC=SC, SV_e=SV_e, SV_p=SV_p, VS_e=VS_e, VS_p=VS_p, dlist=dlist,
                CW=CW, const_rows=const_rows, const_nrows=const_nrows,
                sm_shapes=sm_shapes, sm_order=sm_order, sm_off=sm_off,
                sm_rows=soff, WW=WW, OUTW=OUTW)


# ---------------------------------------------------------------------------
# Fused kernel: embeddings + conv1d + SELU + maxpool + full MLP stack
# ---------------------------------------------------------------------------
def make_fused_kernel(cfg, B):
    L = _layout(cfg)
    S_e, S_p = L["S_e"], L["S_p"]
    C, SC = L["C"], L["SC"]
    SV_e, SV_p = L["SV_e"], L["SV_p"]
    VS_e, VS_p = L["VS_e"], L["VS_p"]
    dlist = L["dlist"]
    cr, smo, sms = L["const_rows"], L["sm_off"], L["sm_shapes"]
    f32, bf16 = jnp.float32, jnp.bfloat16

    def kernel(x_ref, y_ref, const_ref, m1_ref, wsm_ref, wwd_ref, out_ref):
        def crow(name, width):                       # (1, width) f32 constant row
            r = cr[name]
            return const_ref[r:r + 1, :width]

        def wsm(name):                               # bf16 small-slab slice -> f32
            r = smo[name]
            h, w = sms[name]
            return wsm_ref[r:r + h, :w].astype(f32)

        def lin(xv, wname, bname):                   # x @ W + b (f32 accumulate)
            w = sms[wname][1]
            return (jnp.dot(xv, wsm(wname), preferred_element_type=f32)
                    + crow(bname, w))

        # ---- token ids -> lane-major one-hot: oh[b, s*V + v] = [ids[b,s] == v]
        def one_hot(ids_ref, rep_name, rep_rows, vpat_name, width):
            ids_f = ids_ref[...].astype(f32)                            # (B, S)
            r = cr[rep_name]
            rep = const_ref[r:r + rep_rows, :width]                     # (S, S*V) 0/1
            ids_rep = jnp.dot(ids_f, rep, preferred_element_type=f32)   # (B, S*V)
            return jnp.where(ids_rep == crow(vpat_name, width), 1.0, 0.0)

        oh_e = one_hot(x_ref, "Re", S_e, "vpat_e", SV_e)                # (B, SV_e)
        oh_p = one_hot(y_ref, "Rp", S_p, "vpat_p", SV_p)                # (B, SV_p)

        # ---- EHR branch: embedding + Conv1d('same') fused into ONE bf16 matmul
        conv = (jnp.dot(oh_e.astype(bf16), m1_ref[...],
                        preferred_element_type=f32)
                + crow("cbias", SC))                                    # (B, S*C)
        act = SELU_SCALE * jnp.where(
            conv > 0.0, conv,
            SELU_ALPHA * (jnp.exp(jnp.minimum(conv, 0.0)) - 1.0))

        # max_pool1d(K, stride=1, padding=p): lane rolls by d*C, -inf off the ends
        pooled = act
        for i, d in enumerate(dlist):
            m = const_ref[cr["pmask"] + i:cr["pmask"] + i + 1, :SC] > 0.5
            sh = pltpu.roll(act, shift=(-d * C) % SC, axis=1)
            pooled = jnp.maximum(pooled, jnp.where(m, sh, -jnp.inf))

        # pooled's columns (s-outer, c-inner) ARE torch's channel-major flatten
        # (linear1's rows were permuted at pack time) -> no reshape needed.
        h1 = jnp.maximum(lin(pooled, "w1", "b1"), 0.0)
        # TODO(synk): F.dropout defaults to training=True in the source;
        # implemented as identity (inference semantics).
        e3 = lin(h1, "w3", "b3")                                        # (B, 32)

        # ---- PRS branch: embedding + mean + linear9 fused into ONE matmul ----
        p9 = (jnp.dot(oh_p, wsm("w9f"), preferred_element_type=f32)
              + crow("b9", 64))                                         # (B, 64)
        # TODO(synk): source has `out_prs = torch.relu(out_ehr)` which would
        # shape-mismatch linear10; implementing the evidently intended
        # relu(linear9(mean(prs_emb))) instead.
        p10 = lin(jnp.maximum(p9, 0.0), "w10", "b10")                   # (B, 32)

        # ---- encoded head: one pass over stacked rows (torch cat order: ehr; prs)
        z = jnp.concatenate([e3, p10], axis=0)                          # (2B, 32)
        c15 = jnp.maximum(lin(z, "w15", "b15"), 0.0)
        # TODO(synk): dropout -> identity (inference semantics).
        enc = lin(c15, "w16", "b16")                                    # (2B, 16)

        # ---- decoder heads ----
        def softplus(v):  # matches F.softplus (beta=1, threshold=20)
            return jnp.where(v > 20.0, v,
                             jnp.log(1.0 + jnp.exp(jnp.minimum(v, 20.0))))

        h7 = softplus(lin(e3, "w7", "b7"))
        o8 = (jnp.dot(h7, wwd_ref[0:64, :VS_e].astype(f32),
                      preferred_element_type=f32) + crow("b8", VS_e))   # (B, VS_e)
        h11 = softplus(lin(p10, "w11", "b11"))
        o13 = (jnp.dot(h11, wwd_ref[64:128, :VS_p].astype(f32),
                       preferred_element_type=f32) + crow("b13", VS_p))  # (B, VS_p)

        # ---- single lane-dense output slab: rows [o8; o13; enc] ----
        out_ref[...] = jnp.zeros_like(out_ref)
        out_ref[0:B, 0:VS_e] = o8
        out_ref[B:2 * B, 0:VS_p] = o13
        out_ref[2 * B:4 * B, 0:16] = enc

    return kernel, L


# ---------------------------------------------------------------------------
# Parameter init (deterministic, synthetic, torch layout) and one-time packing
# ---------------------------------------------------------------------------
def init_params(key, cfg):
    V_e, V_p = cfg["EHR_vocab"], cfg["PRS_vocab"]
    S_e, S_p = cfg["S_ehr"], cfg["S_prs"]
    E_e, E_p = cfg["ehr_emb"], cfg["prs_emb"]
    K = cfg["kernel_size"]
    ch1 = E_e // 2
    feat_dim = ch1 * S_e

    assert E_e % 2 == 0
    assert E_p == 64, "linear9 is nn.Linear(64, 64); requires prs_emb_size == 64"

    def nrm(k, shape, scale=0.05):
        return scale * jax.random.normal(k, shape, dtype=jnp.float32)

    ks = jax.random.split(key, 32)
    prm = {}
    prm["emb_ehr"] = nrm(ks[0], (V_e, E_e), 0.1).at[0].set(0.0)   # padding_idx=0
    prm["emb_prs"] = nrm(ks[1], (V_p, E_p), 0.1).at[0].set(0.0)   # padding_idx=0
    prm["conv_w"] = nrm(ks[2], (ch1, E_e, K))                     # torch (Cout, Cin, K)
    prm["conv_b"] = nrm(ks[3], (ch1,))
    # linear weights stored as (in, out) with torch's input-index ordering.
    dims = {
        "1": (feat_dim, 64), "3": (64, 32), "7": (32, 64), "8": (64, V_e * S_e),
        "9": (64, 64), "10": (64, 32), "11": (32, 64), "13": (64, V_p * S_p),
        "15": (32, 32), "16": (32, 16),
    }
    ki = 4
    for name, (din, dout) in dims.items():
        prm[f"w{name}"] = nrm(ks[ki], (din, dout)); ki += 1
        prm[f"b{name}"] = nrm(ks[ki], (dout,)); ki += 1
    return prm


def pack_params(params, cfg):
    """One-time repack: fuse the embeddings into the conv / PRS tables, permute
    linear1, pack into 3 bf16 weight slabs + 1 f32 constant slab."""
    L = _layout(cfg)
    V_e, V_p, S_e, S_p = L["V_e"], L["V_p"], L["S_e"], L["S_p"]
    C, K, p = L["C"], L["K"], L["p"]
    SC, SV_e, SV_p = L["SC"], L["SV_e"], L["SV_p"]
    VS_e, VS_p = L["VS_e"], L["VS_p"]
    CW, WW = L["CW"], L["WW"]
    f32 = np.float32

    emb_e = np.asarray(params["emb_ehr"], f32)        # (V_e, E_e), row 0 == 0
    emb_p = np.asarray(params["emb_prs"], f32)        # (V_p, 64),  row 0 == 0
    Wc = np.asarray(params["conv_w"], f32)            # (C, E_e, K)
    cb = np.asarray(params["conv_b"], f32)            # (C,)

    # M1 fuses [token one-hot] -> Conv1d('same') pre-activation:
    #   M1[s_in*V+v, s_out*C+c] = sum_e emb_e[v,e] * Wc[c,e, s_in - s_out + p];
    # zero blocks outside |s_in-s_out| <= p reproduce the zero 'same' padding.
    A = np.einsum("ve,cek->kvc", emb_e, Wc)           # (K, V_e, C)
    M1 = np.zeros((SV_e, SC), f32)
    for s_in in range(S_e):
        for k in range(K):
            s_out = s_in - k + p
            if 0 <= s_out < S_e:
                M1[s_in * V_e:(s_in + 1) * V_e, s_out * C:(s_out + 1) * C] = A[k]

    # W9f fuses [PRS token one-hot] -> linear9(mean(prs_embeddings)) (no bias).
    W9f = np.tile(emb_p, (S_p, 1)) @ np.asarray(params["w9"], f32) / S_p  # (SV_p, 64)

    # linear1 rows: torch flat index c*S+s  ->  kernel column order s*C+c.
    w1 = np.asarray(params["w1"], f32)
    W1p = w1.reshape(C, S_e, 64).transpose(1, 0, 2).reshape(SC, 64)

    # bf16 small slab (width 64)
    sm_src = {"w1": W1p, "w3": params["w3"], "w7": params["w7"], "w9f": W9f,
              "w10": params["w10"], "w11": params["w11"],
              "w15": params["w15"], "w16": params["w16"]}
    w_small = np.zeros((L["sm_rows"], 64), f32)
    for n in L["sm_order"]:
        r = L["sm_off"][n]
        h, w = L["sm_shapes"][n]
        w_small[r:r + h, :w] = np.asarray(sm_src[n], f32)

    # bf16 wide slab: rows 0:64 -> linear8 weight, rows 64:128 -> linear13 weight
    w_wide = np.zeros((128, WW), f32)
    w_wide[0:64, :VS_e] = np.asarray(params["w8"], f32)
    w_wide[64:128, :VS_p] = np.asarray(params["w13"], f32)

    # f32 constant slab (one-hot helpers, pool masks, tiled conv bias, biases)
    cr = L["const_rows"]
    const = np.zeros((L["const_nrows"], CW), f32)
    const[cr["Re"]:cr["Re"] + S_e, :SV_e] = np.kron(np.eye(S_e, dtype=f32),
                                                    np.ones((1, V_e), f32))
    const[cr["Rp"]:cr["Rp"] + S_p, :SV_p] = np.kron(np.eye(S_p, dtype=f32),
                                                    np.ones((1, V_p), f32))
    const[cr["vpat_e"], :SV_e] = np.tile(np.arange(V_e, dtype=f32), S_e)
    const[cr["vpat_p"], :SV_p] = np.tile(np.arange(V_p, dtype=f32), S_p)
    s_idx = np.arange(S_e)
    for i, d in enumerate(L["dlist"]):
        valid = ((s_idx + d >= 0) & (s_idx + d < S_e)).astype(f32)
        const[cr["pmask"] + i, :SC] = np.repeat(valid, C)
    const[cr["cbias"], :SC] = np.tile(cb, S_e)
    bias_w = {"b1": 64, "b3": 32, "b7": 64, "b8": VS_e, "b9": 64, "b10": 32,
              "b11": 64, "b13": VS_p, "b15": 32, "b16": 16}
    for n, w in bias_w.items():
        const[cr[n], :w] = np.asarray(params[n], f32)

    return {"m1": jnp.asarray(M1, jnp.bfloat16),
            "w_small": jnp.asarray(w_small, jnp.bfloat16),
            "w_wide": jnp.asarray(w_wide, jnp.bfloat16),
            "const": jnp.asarray(const, jnp.float32)}


# ---------------------------------------------------------------------------
# Full forward
# ---------------------------------------------------------------------------
def ehr_encoding_forward(packed, x, y, cfg):
    B, S_e = x.shape
    S_p = y.shape[1]
    kernel, L = make_fused_kernel(cfg, B)
    V_e, V_p = L["V_e"], L["V_p"]
    VS_e, VS_p, OUTW = L["VS_e"], L["VS_p"], L["OUTW"]

    # Advisory cost hint so XLA can overlap this tiny, dispatch-bound call.
    mm = [(B, S_e, L["SV_e"]), (B, S_p, L["SV_p"]),
          (B, L["SV_e"], L["SC"]), (B, L["SC"], 64), (B, 64, 32),
          (B, L["SV_p"], 64), (B, 64, 32),
          (2 * B, 32, 32), (2 * B, 32, 16),
          (B, 32, 64), (B, 64, VS_e), (B, 32, 64), (B, 64, VS_p)]
    flops = 2 * sum(m * k * n for m, k, n in mm)
    bytes_in = sum(int(np.prod(a.shape)) * a.dtype.itemsize
                   for a in (x, y, packed["const"], packed["m1"],
                             packed["w_small"], packed["w_wide"]))
    cost = pl.CostEstimate(flops=flops,
                           transcendentals=B * (L["SC"] + 4 * 64),
                           bytes_accessed=bytes_in + 4 * B * OUTW * 4)

    out = pl.pallas_call(
        kernel,
        out_shape=jax.ShapeDtypeStruct((4 * B, OUTW), jnp.float32),
        cost_estimate=cost,
    )(x, y, packed["const"], packed["m1"], packed["w_small"], packed["w_wide"])

    # strip lane padding + torch's final .view reshapes (row-major, matching)
    out_ehr = out[:B, :VS_e].reshape(B, V_e, S_e)
    out_prs = out[B:2 * B, :VS_p].reshape(B, V_p, S_p)
    encoded_vec = out[2 * B:4 * B, :16]                     # (2B, 16), ehr rows first
    return out_ehr, out_prs, encoded_vec


if __name__ == "__main__":
    cfg = dict(EHR_vocab=30, PRS_vocab=20, S_ehr=16, S_prs=8,
               ehr_emb=32, prs_emb=64, kernel_size=3)

    key = jax.random.PRNGKey(0)
    kp, kx, ky = jax.random.split(key, 3)
    params = init_params(kp, cfg)
    packed = pack_params(params, cfg)

    x = jax.random.randint(kx, (2, cfg["S_ehr"]), 0, cfg["EHR_vocab"], dtype=jnp.int32)
    y = jax.random.randint(ky, (2, cfg["S_prs"]), 0, cfg["PRS_vocab"], dtype=jnp.int32)

    fwd = jax.jit(lambda p, a, b: ehr_encoding_forward(p, a, b, cfg))
    out_ehr, out_prs, encoded_vec = fwd(packed, x, y)
    jax.block_until_ready((out_ehr, out_prs, encoded_vec))

    assert out_ehr.shape == (2, cfg["EHR_vocab"], cfg["S_ehr"])
    assert out_prs.shape == (2, cfg["PRS_vocab"], cfg["S_prs"])
    assert encoded_vec.shape == (4, 16)
    assert bool(jnp.isfinite(out_ehr).all())
    assert bool(jnp.isfinite(out_prs).all())
    assert bool(jnp.isfinite(encoded_vec).all())
    print("KERNEL_OK")
</pallas_src>

<mosaic_0001>
module attributes {stable_mosaic.version = 11 : i64} {
  func.func @kernel(%arg0: memref<2x16xi32, #tpu.memory_space<vmem>>, %arg1: memref<2x8xi32, #tpu.memory_space<vmem>>, %arg2: memref<39x480xf32, #tpu.memory_space<vmem>>, %arg3: memref<480x256xbf16, #tpu.memory_space<vmem>>, %arg4: memref<672x64xbf16, #tpu.memory_space<vmem>>, %arg5: memref<128x512xbf16, #tpu.memory_space<vmem>>, %arg6: memref<8x512xf32, #tpu.memory_space<vmem>>) attributes {dimension_semantics = [], scalar_prefetch = 0 : i64, scratch_operands = 0 : i64, tpu.core_type = #tpu.core_type<tc>} {
    %c0 = arith.constant 0 : index
    %c0_0 = arith.constant 0 : index
    %0 = vector.load %arg0[%c0, %c0_0] : memref<2x16xi32, #tpu.memory_space<vmem>>, vector<2x16xi32>
    %1 = arith.sitofp %0 : vector<2x16xi32> to vector<2x16xf32>
    %c0_1 = arith.constant 0 : index
    %c0_2 = arith.constant 0 : index
    %2 = vector.load %arg2[%c0_1, %c0_2] : memref<39x480xf32, #tpu.memory_space<vmem>>, vector<16x480xf32>
    %cst = arith.constant dense<0.000000e+00> : vector<2x480xf32>
    %3 = tpu.matmul %1, %2, %cst {dimension_numbers = #tpu.dot_dimension_numbers<[1], [0], [0], [1], [0, 0, 1, 1], [], []>} : vector<2x16xf32>, vector<16x480xf32>, vector<2x480xf32> -> vector<2x480xf32>
    %c24 = arith.constant 24 : index
    %c0_3 = arith.constant 0 : index
    %4 = vector.load %arg2[%c24, %c0_3] : memref<39x480xf32, #tpu.memory_space<vmem>>, vector<1x480xf32>
    %5 = vector.broadcast %4 : vector<1x480xf32> to vector<2x480xf32>
    %6 = arith.cmpf oeq, %3, %5 : vector<2x480xf32>
    %cst_4 = arith.constant 1.000000e+00 : f32
    %cst_5 = arith.constant 0.000000e+00 : f32
    %7 = vector.broadcast %cst_4 : f32 to vector<2x480xf32>
    %8 = vector.broadcast %cst_5 : f32 to vector<2x480xf32>
    %9 = arith.select %6, %7, %8 : vector<2x480xi1>, vector<2x480xf32>
    %c0_6 = arith.constant 0 : index
    %c0_7 = arith.constant 0 : index
    %10 = vector.load %arg1[%c0_6, %c0_7] : memref<2x8xi32, #tpu.memory_space<vmem>>, vector<2x8xi32>
    %11 = arith.sitofp %10 : vector<2x8xi32> to vector<2x8xf32>
    %c16 = arith.constant 16 : index
    %c0_8 = arith.constant 0 : index
    %12 = vector.load %arg2[%c16, %c0_8] : memref<39x480xf32, #tpu.memory_space<vmem>>, vector<8x160xf32>
    %cst_9 = arith.constant dense<0.000000e+00> : vector<2x160xf32>
    %13 = tpu.matmul %11, %12, %cst_9 {dimension_numbers = #tpu.dot_dimension_numbers<[1], [0], [0], [1], [0, 0, 1, 1], [], []>} : vector<2x8xf32>, vector<8x160xf32>, vector<2x160xf32> -> vector<2x160xf32>
    %c25 = arith.constant 25 : index
    %c0_10 = arith.constant 0 : index
    %14 = vector.load %arg2[%c25, %c0_10] : memref<39x480xf32, #tpu.memory_space<vmem>>, vector<1x160xf32>
    %15 = vector.broadcast %14 : vector<1x160xf32> to vector<2x160xf32>
    %16 = arith.cmpf oeq, %13, %15 : vector<2x160xf32>
    %cst_11 = arith.constant 1.000000e+00 : f32
    %cst_12 = arith.constant 0.000000e+00 : f32
    %17 = vector.broadcast %cst_11 : f32 to vector<2x160xf32>
    %18 = vector.broadcast %cst_12 : f32 to vector<2x160xf32>
    %19 = arith.select %16, %17, %18 : vector<2x160xi1>, vector<2x160xf32>
    %20 = arith.truncf %9 : vector<2x480xf32> to vector<2x480xbf16>
    %c0_13 = arith.constant 0 : index
    %c0_14 = arith.constant 0 : index
    %21 = vector.load %arg3[%c0_13, %c0_14] : memref<480x256xbf16, #tpu.memory_space<vmem>>, vector<480x256xbf16>
    %cst_15 = arith.constant dense<0.000000e+00> : vector<2x256xf32>
    %22 = tpu.matmul %20, %21, %cst_15 {dimension_numbers = #tpu.dot_dimension_numbers<[1], [0], [0], [1], [0, 0, 1, 1], [], []>} : vector<2x480xbf16>, vector<480x256xbf16>, vector<2x256xf32> -> vector<2x256xf32>
    %c28 = arith.constant 28 : index
    %c0_16 = arith.constant 0 : index
    %23 = vector.load %arg2[%c28, %c0_16] : memref<39x480xf32, #tpu.memory_space<vmem>>, vector<1x256xf32>
    %24 = vector.broadcast %23 : vector<1x256xf32> to vector<2x256xf32>
    %25 = arith.addf %22, %24 : vector<2x256xf32>
    %cst_17 = arith.constant 0.000000e+00 : f32
    %26 = vector.broadcast %cst_17 : f32 to vector<2x256xf32>
    %27 = arith.cmpf ogt, %25, %26 : vector<2x256xf32>
    %cst_18 = arith.constant 0.000000e+00 : f32
    %28 = vector.broadcast %cst_18 : f32 to vector<2x256xf32>
    %29 = arith.minimumf %25, %28 : vector<2x256xf32>
    %30 = math.exp %29 : vector<2x256xf32>
    %cst_19 = arith.constant 1.000000e+00 : f32
    %31 = vector.broadcast %cst_19 : f32 to vector<2x256xf32>
    %32 = arith.subf %30, %31 : vector<2x256xf32>
    %cst_20 = arith.constant 1.67326319 : f32
    %33 = vector.broadcast %cst_20 : f32 to vector<2x256xf32>
    %34 = arith.mulf %33, %32 : vector<2x256xf32>
    %35 = arith.select %27, %25, %34 : vector<2x256xi1>, vector<2x256xf32>
    %cst_21 = arith.constant 1.05070102 : f32
    %36 = vector.broadcast %cst_21 : f32 to vector<2x256xf32>
    %37 = arith.mulf %36, %35 : vector<2x256xf32>
    %c26 = arith.constant 26 : index
    %c0_22 = arith.constant 0 : index
    %38 = vector.load %arg2[%c26, %c0_22] : memref<39x480xf32, #tpu.memory_space<vmem>>, vector<1x256xf32>
    %cst_23 = arith.constant 5.000000e-01 : f32
    %39 = vector.broadcast %cst_23 : f32 to vector<1x256xf32>
    %40 = arith.cmpf ogt, %38, %39 : vector<1x256xf32>
    %c16_i32 = arith.constant 16 : i32
    %41 = tpu.dynamic_rotate %37 by %c16_i32 dim 1 : vector<2x256xf32>, i32 -> vector<2x256xf32>
    %cst_24 = arith.constant 0xFF800000 : f32
    %42 = vector.shape_cast %40 : vector<1x256xi1> to vector<1x256xi1>
    %43 = vector.broadcast %42 : vector<1x256xi1> to vector<2x256xi1>
    %44 = vector.broadcast %cst_24 : f32 to vector<2x256xf32>
    %45 = arith.select %43, %41, %44 : vector<2x256xi1>, vector<2x256xf32>
    %46 = arith.maximumf %37, %45 : vector<2x256xf32>
    %c27 = arith.constant 27 : index
    %c0_25 = arith.constant 0 : index
    %47 = vector.load %arg2[%c27, %c0_25] : memref<39x480xf32, #tpu.memory_space<vmem>>, vector<1x256xf32>
    %cst_26 = arith.constant 5.000000e-01 : f32
    %48 = vector.broadcast %cst_26 : f32 to vector<1x256xf32>
    %49 = arith.cmpf ogt, %47, %48 : vector<1x256xf32>
    %c240_i32 = arith.constant 240 : i32
    %50 = tpu.dynamic_rotate %37 by %c240_i32 dim 1 : vector<2x256xf32>, i32 -> vector<2x256xf32>
    %cst_27 = arith.constant 0xFF800000 : f32
    %51 = vector.shape_cast %49 : vector<1x256xi1> to vector<1x256xi1>
    %52 = vector.broadcast %51 : vector<1x256xi1> to vector<2x256xi1>
    %53 = vector.broadcast %cst_27 : f32 to vector<2x256xf32>
    %54 = arith.select %52, %50, %53 : vector<2x256xi1>, vector<2x256xf32>
    %55 = arith.maximumf %46, %54 : vector<2x256xf32>
    %c0_28 = arith.constant 0 : index
    %c0_29 = arith.constant 0 : index
    %56 = vector.load %arg4[%c0_28, %c0_29] : memref<672x64xbf16, #tpu.memory_space<vmem>>, vector<256x64xbf16>
    %57 = arith.extf %56 : vector<256x64xbf16> to vector<256x64xf32>
    %cst_30 = arith.constant dense<0.000000e+00> : vector<2x64xf32>
    %58 = tpu.matmul %55, %57, %cst_30 {dimension_numbers = #tpu.dot_dimension_numbers<[1], [0], [0], [1], [0, 0, 1, 1], [], []>} : vector<2x256xf32>, vector<256x64xf32>, vector<2x64xf32> -> vector<2x64xf32>
    %c29 = arith.constant 29 : index
    %c0_31 = arith.constant 0 : index
    %59 = vector.load %arg2[%c29, %c0_31] : memref<39x480xf32, #tpu.memory_space<vmem>>, vector<1x64xf32>
    %60 = vector.broadcast %59 : vector<1x64xf32> to vector<2x64xf32>
    %61 = arith.addf %58, %60 : vector<2x64xf32>
    %cst_32 = arith.constant 0.000000e+00 : f32
    %62 = vector.broadcast %cst_32 : f32 to vector<2x64xf32>
    %63 = arith.maximumf %61, %62 : vector<2x64xf32>
    %c256 = arith.constant 256 : index
    %c0_33 = arith.constant 0 : index
    %64 = vector.load %arg4[%c256, %c0_33] : memref<672x64xbf16, #tpu.memory_space<vmem>>, vector<64x32xbf16>
    %65 = arith.extf %64 : vector<64x32xbf16> to vector<64x32xf32>
    %cst_34 = arith.constant dense<0.000000e+00> : vector<2x32xf32>
    %66 = tpu.matmul %63, %65, %cst_34 {dimension_numbers = #tpu.dot_dimension_numbers<[1], [0], [0], [1], [0, 0, 1, 1], [], []>} : vector<2x64xf32>, vector<64x32xf32>, vector<2x32xf32> -> vector<2x32xf32>
    %c30 = arith.constant 30 : index
    %c0_35 = arith.constant 0 : index
    %67 = vector.load %arg2[%c30, %c0_35] : memref<39x480xf32, #tpu.memory_space<vmem>>, vector<1x32xf32>
    %68 = vector.broadcast %67 : vector<1x32xf32> to vector<2x32xf32>
    %69 = arith.addf %66, %68 : vector<2x32xf32>
    %c352 = arith.constant 352 : index
    %c0_36 = arith.constant 0 : index
    %70 = vector.load %arg4[%c352, %c0_36] : memref<672x64xbf16, #tpu.memory_space<vmem>>, vector<160x64xbf16>
    %71 = arith.extf %70 : vector<160x64xbf16> to vector<160x64xf32>
    %cst_37 = arith.constant dense<0.000000e+00> : vector<2x64xf32>
    %72 = tpu.matmul %19, %71, %cst_37 {dimension_numbers = #tpu.dot_dimension_numbers<[1], [0], [0], [1], [0, 0, 1, 1], [], []>} : vector<2x160xf32>, vector<160x64xf32>, vector<2x64xf32> -> vector<2x64xf32>
    %c33 = arith.constant 33 : index
    %c0_38 = arith.constant 0 : index
    %73 = vector.load %arg2[%c33, %c0_38] : memref<39x480xf32, #tpu.memory_space<vmem>>, vector<1x64xf32>
    %74 = vector.broadcast %73 : vector<1x64xf32> to vector<2x64xf32>
    %75 = arith.addf %72, %74 : vector<2x64xf32>
    %cst_39 = arith.constant 0.000000e+00 : f32
    %76 = vector.broadcast %cst_39 : f32 to vector<2x64xf32>
    %77 = arith.maximumf %75, %76 : vector<2x64xf32>
    %c512 = arith.constant 512 : index
    %c0_40 = arith.constant 0 : index
    %78 = vector.load %arg4[%c512, %c0_40] : memref<672x64xbf16, #tpu.memory_space<vmem>>, vector<64x32xbf16>
    %79 = arith.extf %78 : vector<64x32xbf16> to vector<64x32xf32>
    %cst_41 = arith.constant dense<0.000000e+00> : vector<2x32xf32>
    %80 = tpu.matmul %77, %79, %cst_41 {dimension_numbers = #tpu.dot_dimension_numbers<[1], [0], [0], [1], [0, 0, 1, 1], [], []>} : vector<2x64xf32>, vector<64x32xf32>, vector<2x32xf32> -> vector<2x32xf32>
    %c34 = arith.constant 34 : index
    %c0_42 = arith.constant 0 : index
    %81 = vector.load %arg2[%c34, %c0_42] : memref<39x480xf32, #tpu.memory_space<vmem>>, vector<1x32xf32>
    %82 = vector.broadcast %81 : vector<1x32xf32> to vector<2x32xf32>
    %83 = arith.addf %80, %82 : vector<2x32xf32>
    %84 = tpu.concatenate %69, %83 in 0 : vector<2x32xf32>, vector<2x32xf32> -> vector<4x32xf32>
    %c608 = arith.constant 608 : index
    %c0_43 = arith.constant 0 : index
    %85 = vector.load %arg4[%c608, %c0_43] : memref<672x64xbf16, #tpu.memory_space<vmem>>, vector<32x32xbf16>
    %86 = arith.extf %85 : vector<32x32xbf16> to vector<32x32xf32>
    %cst_44 = arith.constant dense<0.000000e+00> : vector<4x32xf32>
    %87 = tpu.matmul %84, %86, %cst_44 {dimension_numbers = #tpu.dot_dimension_numbers<[1], [0], [0], [1], [0, 0, 1, 1], [], []>} : vector<4x32xf32>, vector<32x32xf32>, vector<4x32xf32> -> vector<4x32xf32>
    %c37 = arith.constant 37 : index
    %c0_45 = arith.constant 0 : index
    %88 = vector.load %arg2[%c37, %c0_45] : memref<39x480xf32, #tpu.memory_space<vmem>>, vector<1x32xf32>
    %89 = vector.broadcast %88 : vector<1x32xf32> to vector<4x32xf32>
    %90 = arith.addf %87, %89 : vector<4x32xf32>
    %cst_46 = arith.constant 0.000000e+00 : f32
    %91 = vector.broadcast %cst_46 : f32 to vector<4x32xf32>
    %92 = arith.maximumf %90, %91 : vector<4x32xf32>
    %c640 = arith.constant 640 : index
    %c0_47 = arith.constant 0 : index
    %93 = vector.load %arg4[%c640, %c0_47] : memref<672x64xbf16, #tpu.memory_space<vmem>>, vector<32x16xbf16>
    %94 = arith.extf %93 : vector<32x16xbf16> to vector<32x16xf32>
    %cst_48 = arith.constant dense<0.000000e+00> : vector<4x16xf32>
    %95 = tpu.matmul %92, %94, %cst_48 {dimension_numbers = #tpu.dot_dimension_numbers<[1], [0], [0], [1], [0, 0, 1, 1], [], []>} : vector<4x32xf32>, vector<32x16xf32>, vector<4x16xf32> -> vector<4x16xf32>
    %c38 = arith.constant 38 : index
    %c0_49 = arith.constant 0 : index
    %96 = vector.load %arg2[%c38, %c0_49] : memref<39x480xf32, #tpu.memory_space<vmem>>, vector<1x16xf32>
    %97 = vector.broadcast %96 : vector<1x16xf32> to vector<4x16xf32>
    %98 = arith.addf %95, %97 : vector<4x16xf32>
    %c320 = arith.constant 320 : index
    %c0_50 = arith.constant 0 : index
    %99 = vector.load %arg4[%c320, %c0_50] : memref<672x64xbf16, #tpu.memory_space<vmem>>, vector<32x64xbf16>
    %100 = arith.extf %99 : vector<32x64xbf16> to vector<32x64xf32>
    %cst_51 = arith.constant dense<0.000000e+00> : vector<2x64xf32>
    %101 = tpu.matmul %69, %100, %cst_51 {dimension_numbers = #tpu.dot_dimension_numbers<[1], [0], [0], [1], [0, 0, 1, 1], [], []>} : vector<2x32xf32>, vector<32x64xf32>, vector<2x64xf32> -> vector<2x64xf32>
    %c31 = arith.constant 31 : index
    %c0_52 = arith.constant 0 : index
    %102 = vector.load %arg2[%c31, %c0_52] : memref<39x480xf32, #tpu.memory_space<vmem>>, vector<1x64xf32>
    %103 = vector.broadcast %102 : vector<1x64xf32> to vector<2x64xf32>
    %104 = arith.addf %101, %103 : vector<2x64xf32>
    %cst_53 = arith.constant 2.000000e+01 : f32
    %105 = vector.broadcast %cst_53 : f32 to vector<2x64xf32>
    %106 = arith.cmpf ogt, %104, %105 : vector<2x64xf32>
    %cst_54 = arith.constant 2.000000e+01 : f32
    %107 = vector.broadcast %cst_54 : f32 to vector<2x64xf32>
    %108 = arith.minimumf %104, %107 : vector<2x64xf32>
    %109 = math.exp %108 : vector<2x64xf32>
    %cst_55 = arith.constant 1.000000e+00 : f32
    %110 = vector.broadcast %cst_55 : f32 to vector<2x64xf32>
    %111 = arith.addf %110, %109 : vector<2x64xf32>
    %112 = math.log %111 : vector<2x64xf32>
    %113 = arith.select %106, %104, %112 : vector<2x64xi1>, vector<2x64xf32>
    %c0_56 = arith.constant 0 : index
    %c0_57 = arith.constant 0 : index
    %114 = vector.load %arg5[%c0_56, %c0_57] : memref<128x512xbf16, #tpu.memory_space<vmem>>, vector<64x480xbf16>
    %115 = arith.extf %114 : vector<64x480xbf16> to vector<64x480xf32>
    %cst_58 = arith.constant dense<0.000000e+00> : vector<2x480xf32>
    %116 = tpu.matmul %113, %115, %cst_58 {dimension_numbers = #tpu.dot_dimension_numbers<[1], [0], [0], [1], [0, 0, 1, 1], [], []>} : vector<2x64xf32>, vector<64x480xf32>, vector<2x480xf32> -> vector<2x480xf32>
    %c32 = arith.constant 32 : index
    %c0_59 = arith.constant 0 : index
    %117 = vector.load %arg2[%c32, %c0_59] : memref<39x480xf32, #tpu.memory_space<vmem>>, vector<1x480xf32>
    %118 = vector.broadcast %117 : vector<1x480xf32> to vector<2x480xf32>
    %119 = arith.addf %116, %118 : vector<2x480xf32>
    %c576 = arith.constant 576 : index
    %c0_60 = arith.constant 0 : index
    %120 = vector.load %arg4[%c576, %c0_60] : memref<672x64xbf16, #tpu.memory_space<vmem>>, vector<32x64xbf16>
    %121 = arith.extf %120 : vector<32x64xbf16> to vector<32x64xf32>
    %cst_61 = arith.constant dense<0.000000e+00> : vector<2x64xf32>
    %122 = tpu.matmul %83, %121, %cst_61 {dimension_numbers = #tpu.dot_dimension_numbers<[1], [0], [0], [1], [0, 0, 1, 1], [], []>} : vector<2x32xf32>, vector<32x64xf32>, vector<2x64xf32> -> vector<2x64xf32>
    %c35 = arith.constant 35 : index
    %c0_62 = arith.constant 0 : index
    %123 = vector.load %arg2[%c35, %c0_62] : memref<39x480xf32, #tpu.memory_space<vmem>>, vector<1x64xf32>
    %124 = vector.broadcast %123 : vector<1x64xf32> to vector<2x64xf32>
    %125 = arith.addf %122, %124 : vector<2x64xf32>
    %cst_63 = arith.constant 2.000000e+01 : f32
    %126 = vector.broadcast %cst_63 : f32 to vector<2x64xf32>
    %127 = arith.cmpf ogt, %125, %126 : vector<2x64xf32>
    %cst_64 = arith.constant 2.000000e+01 : f32
    %128 = vector.broadcast %cst_64 : f32 to vector<2x64xf32>
    %129 = arith.minimumf %125, %128 : vector<2x64xf32>
    %130 = math.exp %129 : vector<2x64xf32>
    %cst_65 = arith.constant 1.000000e+00 : f32
    %131 = vector.broadcast %cst_65 : f32 to vector<2x64xf32>
    %132 = arith.addf %131, %130 : vector<2x64xf32>
    %133 = math.log %132 : vector<2x64xf32>
    %134 = arith.select %127, %125, %133 : vector<2x64xi1>, vector<2x64xf32>
    %c64 = arith.constant 64 : index
    %c0_66 = arith.constant 0 : index
    %135 = vector.load %arg5[%c64, %c0_66] : memref<128x512xbf16, #tpu.memory_space<vmem>>, vector<64x160xbf16>
    %136 = arith.extf %135 : vector<64x160xbf16> to vector<64x160xf32>
    %cst_67 = arith.constant dense<0.000000e+00> : vector<2x160xf32>
    %137 = tpu.matmul %134, %136, %cst_67 {dimension_numbers = #tpu.dot_dimension_numbers<[1], [0], [0], [1], [0, 0, 1, 1], [], []>} : vector<2x64xf32>, vector<64x160xf32>, vector<2x160xf32> -> vector<2x160xf32>
    %c36 = arith.constant 36 : index
    %c0_68 = arith.constant 0 : index
    %138 = vector.load %arg2[%c36, %c0_68] : memref<39x480xf32, #tpu.memory_space<vmem>>, vector<1x160xf32>
    %139 = vector.broadcast %138 : vector<1x160xf32> to vector<2x160xf32>
    %140 = arith.addf %137, %139 : vector<2x160xf32>
    %cst_69 = arith.constant 0.000000e+00 : f32
    %141 = vector.broadcast %cst_69 : f32 to vector<8x512xf32>
    %c0_70 = arith.constant 0 : index
    %c0_71 = arith.constant 0 : index
    %142 = vector.load %arg6[%c0_70, %c0_71] : memref<8x512xf32, #tpu.memory_space<vmem>>, vector<8x512xf32>
    tpu.vector_store %arg6[%c0_70, %c0_71], %141 {strides = array<i32>} : memref<8x512xf32, #tpu.memory_space<vmem>>, vector<8x512xf32>,
    %c0_72 = arith.constant 0 : index
    %c0_73 = arith.constant 0 : index
    %143 = vector.load %arg6[%c0_72, %c0_73] : memref<8x512xf32, #tpu.memory_space<vmem>>, vector<2x480xf32>
    tpu.vector_store %arg6[%c0_72, %c0_73], %119 {strides = array<i32>} : memref<8x512xf32, #tpu.memory_space<vmem>>, vector<2x480xf32>,
    %c2 = arith.constant 2 : index
    %c0_74 = arith.constant 0 : index
    %144 = vector.load %arg6[%c2, %c0_74] : memref<8x512xf32, #tpu.memory_space<vmem>>, vector<2x160xf32>
    tpu.vector_store %arg6[%c2, %c0_74], %140 {strides = array<i32>} : memref<8x512xf32, #tpu.memory_space<vmem>>, vector<2x160xf32>,
    %c4 = arith.constant 4 : index
    %c0_75 = arith.constant 0 : index
    %145 = vector.load %arg6[%c4, %c0_75] : memref<8x512xf32, #tpu.memory_space<vmem>>, vector<4x16xf32>
    tpu.vector_store %arg6[%c4, %c0_75], %98 {strides = array<i32>} : memref<8x512xf32, #tpu.memory_space<vmem>>, vector<4x16xf32>,
    return
  }
}

</mosaic_0001>

<llo_original>
// kernel: _lambda_.1
$region0: #{_lambda_.1}
  #allocation0 [shape = 'u32[]', space=smem, size = 0x4, offset = 0x4, fixed_abs, tag = 'smem constant byte address 0x4 - core index']
  #allocation1 [shape = 'u32[72,128]{1,0:T(1,128)}', space=vmem, size = 0x9000, scoped, tag = 'internal scratch']
  %s0 = inlined_call_operand.vmem [shape: s32[2,16], index: 0, kind: input, shape index: {}]
  %s1 = inlined_call_operand.vmem [shape: s32[2,8], index: 1, kind: input, shape index: {}]
  %s2 = inlined_call_operand.hbm [shape: f32[39,480], index: 2, kind: input, shape index: {}]
  %s3 = inlined_call_operand.vmem [shape: bf16[480,256], index: 3, kind: input, shape index: {}]
  %s4 = inlined_call_operand.vmem [shape: bf16[672,64], index: 4, kind: input, shape index: {}]
  %s5 = inlined_call_operand.hbm [shape: bf16[128,512], index: 5, kind: input, shape index: {}]
  %s6 = inlined_call_operand.vmem [shape: f32[8,512], index: 6, kind: output, shape index: {}]
  %s7 = sld [smem:[#allocation0]]
  $region42: #{_lambda_.1} parent=0
    _
  %s9 = ssub.s32 1, %s7
  %s10 = scalar_select 0, %s9, %s7
  $region1: #{_lambda_.1} parent=0
    #allocation2 [shape = 'u8[81920]{0}', space=vmem, size = 0x14000, scoped, tag = 'input window, operand 2, single buffered']
    #allocation3 [shape = 's32[1]{0}', space=sflag, size = 0x4, scoped, tag = 'scoped memory for _lambda_.1']
    #allocation4 [shape = 'u8[131072]{0}', space=vmem, size = 0x20000, scoped, tag = 'input window, operand 5, single buffered']
    #allocation5 [shape = 's32[1]{0}', space=sflag, size = 0x4, scoped, tag = 'scoped memory for _lambda_.1']
    %11 = vsyncpa [#allocation3], 0
    %12 = vsyncpa [#allocation5], 0
    // Predicated region
    $region2: #{_lambda_.1} parent=1 // pred_check
      _
    $region3: #{_lambda_.1} parent=1 // pred_check_branch
      %14 = sbr.rel (0) target = $region5
    $region4: #{_lambda_.1} parent=1 // pred_region
      _
    $region5: #{_lambda_.1} parent=1 // pred_fallthru
      _
    // Predicated region
    $region6: #{_lambda_.1} parent=1 // pred_check
      _
    $region7: #{_lambda_.1} parent=1 // pred_check_branch
      %16 = sbr.rel (0) target = $region9
    $region8: #{_lambda_.1} parent=1 // pred_region
      _
    $region9: #{_lambda_.1} parent=1 // pred_fallthru
      _
    // Predicated region
    $region10: #{_lambda_.1} parent=1 // pred_check
      _
    $region11: #{_lambda_.1} parent=1 // pred_check_branch
      %18 = sbr.rel (0) target = $region13
    $region12: #{_lambda_.1} parent=1 // pred_region
      %20 = vsyncadd [#allocation3], 0
      %s21 = sshll.u32 %s2, 4
      %s22 = int_to_ptr.hbm [resolvable:$true] %s21
      %s23 = sshll.u32 [#allocation2], 4
      %s24 = int_to_ptr.vmem [resolvable:$true] %s23
      %29 = dma.hbm_to_vmem [thread:$0]  %s22, 2560, %s24, [#allocation3], 512, 512, 32
    $region13: #{_lambda_.1} parent=1 // pred_fallthru
      _
    // Predicated region
    $region14: #{_lambda_.1} parent=1 // pred_check
      _
    $region15: #{_lambda_.1} parent=1 // pred_check_branch
      %31 = sbr.rel (0) target = $region17
    $region16: #{_lambda_.1} parent=1 // pred_region
      _
    $region17: #{_lambda_.1} parent=1 // pred_fallthru
      _
    // Predicated region
    $region18: #{_lambda_.1} parent=1 // pred_check
      _
    $region19: #{_lambda_.1} parent=1 // pred_check_branch
      %33 = sbr.rel (0) target = $region21
    $region20: #{_lambda_.1} parent=1 // pred_region
      _
    $region21: #{_lambda_.1} parent=1 // pred_fallthru
      _
    // Predicated region
    $region22: #{_lambda_.1} parent=1 // pred_check
      _
    $region23: #{_lambda_.1} parent=1 // pred_check_branch
      %35 = sbr.rel (0) target = $region25
    $region24: #{_lambda_.1} parent=1 // pred_region
      %37 = vsyncadd [#allocation5], 0
      %s38 = sshll.u32 %s5, 4
      %s39 = int_to_ptr.hbm [resolvable:$true] %s38
      %s40 = sshll.u32 [#allocation4], 4
      %s41 = int_to_ptr.vmem [resolvable:$true] %s40
      %46 = dma.hbm_to_vmem [thread:$0]  %s39, 4096, %s41, [#allocation5], 256, 256, 16
    $region25: #{_lambda_.1} parent=1 // pred_fallthru
      _
    // Predicated region
    $region26: #{_lambda_.1} parent=1 // pred_check
      _
    $region27: #{_lambda_.1} parent=1 // pred_check_branch
      %48 = sbr.rel (0) target = $region29
    $region28: #{_lambda_.1} parent=1 // pred_region
      %50 = dma.done [#allocation3], 2560
    $region29: #{_lambda_.1} parent=1 // pred_fallthru
      _
    // Predicated region
    $region30: #{_lambda_.1} parent=1 // pred_check
      _
    $region31: #{_lambda_.1} parent=1 // pred_check_branch
      %52 = sbr.rel (0) target = $region33
    $region32: #{_lambda_.1} parent=1 // pred_region
      %54 = dma.done [#allocation5], 4096
    $region33: #{_lambda_.1} parent=1 // pred_fallthru
      _
    %v56 = vld [vmem:[%s0] sm:$0x3]
    %v57 = vcvt.s32.f32 %v56
    %v58 = vld [vmem:[#allocation2] sm:$0xff]
    %v59 = vld [vmem:[#allocation2 + $0x8] sm:$0xff]
    %v60 = vld [vmem:[#allocation2 + $0x10] sm:$0xff]
    %v61 = vld [vmem:[#allocation2 + $0x18] sm:$0xff]
    %v62 = vld [vmem:[#allocation2 + $0x20] sm:$0xff]
    %v63 = vld [vmem:[#allocation2 + $0x28] sm:$0xff]
    %v64 = vld [vmem:[#allocation2 + $0x30] sm:$0xff]
    %v65 = vld [vmem:[#allocation2 + $0x38] sm:$0xff]
    %vm66 = vcmask 130048
    %v68 = vsel %vm66, %v57, 0
    %70 = vmatpush.msra.mxu0 0.0
    %71 = vmatpush.msra.mxu0 0.0
    %72 = vmatpush.msra.mxu0 0.0
    %73 = vmatpush.msra.mxu0 0.0
    %74 = vmatpush.msra.mxu0 0.0
    %75 = vmatpush.msra.mxu0 0.0
    %76 = vmatpush.msra.mxu0 0.0
    %77 = vmatpush.msra.mxu0 0.0
    %78 = vmatpush.msra.mxu0 0.0
    %79 = vmatpush.msra.mxu0 0.0
    %80 = vmatpush.msra.mxu0 0.0
    %81 = vmatpush.msra.mxu0 0.0
    %82 = vmatpush.msra.mxu0 0.0
    %83 = vmatpush.msra.mxu0 0.0
    %84 = vmatpush.msra.mxu0 %v62
    %85 = vmatpush.msra.mxu0 %v58
    %86 = vmatmul.f32.gmra.mxu0 %v68
    %v87 = vpop.f32.mrf.mxu0
    %v88 = vadd.f32 0.0, %v87
    %89 = vdwg.mxu0
    %90 = vmatpush.msra.mxu0 0.0
    %91 = vmatpush.msra.mxu0 0.0
    %92 = vmatpush.msra.mxu0 0.0
    %93 = vmatpush.msra.mxu0 0.0
    %94 = vmatpush.msra.mxu0 0.0
    %95 = vmatpush.msra.mxu0 0.0
    %96 = vmatpush.msra.mxu0 0.0
    %97 = vmatpush.msra.mxu0 0.0
    %98 = vmatpush.msra.mxu0 0.0
    %99 = vmatpush.msra.mxu0 0.0
    %100 = vmatpush.msra.mxu0 0.0
    %101 = vmatpush.msra.mxu0 0.0
    %102 = vmatpush.msra.mxu0 0.0
    %103 = vmatpush.msra.mxu0 0.0
    %104 = vmatpush.msra.mxu0 %v63
    %105 = vmatpush.msra.mxu0 %v59
    %106 = vmatmul.f32.gmra.mxu0 %v68
    %v107 = vpop.f32.mrf.mxu0
    %v108 = vadd.f32 0.0, %v107
    %109 = vdwg.mxu0
    %110 = vmatpush.msra.mxu0 0.0
    %111 = vmatpush.msra.mxu0 0.0
    %112 = vmatpush.msra.mxu0 0.0
    %113 = vmatpush.msra.mxu0 0.0
    %114 = vmatpush.msra.mxu0 0.0
    %115 = vmatpush.msra.mxu0 0.0
    %116 = vmatpush.msra.mxu0 0.0
    %117 = vmatpush.msra.mxu0 0.0
    %118 = vmatpush.msra.mxu0 0.0
    %119 = vmatpush.msra.mxu0 0.0
    %120 = vmatpush.msra.mxu0 0.0
    %121 = vmatpush.msra.mxu0 0.0
    %122 = vmatpush.msra.mxu0 0.0
    %123 = vmatpush.msra.mxu0 0.0
    %124 = vmatpush.msra.mxu0 %v64
    %125 = vmatpush.msra.mxu0 %v60
    %126 = vmatmul.f32.gmra.mxu0 %v68
    %v127 = vpop.f32.mrf.mxu0
    %v128 = vadd.f32 0.0, %v127
    %129 = vdwg.mxu0
    %130 = vmatpush.msra.mxu0 0.0
    %131 = vmatpush.msra.mxu0 0.0
    %132 = vmatpush.msra.mxu0 0.0
    %133 = vmatpush.msra.mxu0 0.0
    %134 = vmatpush.msra.mxu0 0.0
    %135 = vmatpush.msra.mxu0 0.0
    %136 = vmatpush.msra.mxu0 0.0
    %137 = vmatpush.msra.mxu0 0.0
    %138 = vmatpush.msra.mxu0 0.0
    %139 = vmatpush.msra.mxu0 0.0
    %140 = vmatpush.msra.mxu0 0.0
    %141 = vmatpush.msra.mxu0 0.0
    %142 = vmatpush.msra.mxu0 0.0
    %143 = vmatpush.msra.mxu0 0.0
    %144 = vmatpush.msra.mxu0 %v65
    %145 = vmatpush.msra.mxu0 %v61
    %146 = vmatmul.f32.gmra.mxu0 %v68
    %v147 = vpop.f32.mrf.mxu0
    %v148 = vadd.f32 0.0, %v147
    %149 = vdwg.mxu0
    %s150 = scalar_lea.vmem [#allocation2], 96
    %v151 = vld [vmem:[%s150] ss:$8 sm:$0xf]
    %v153 = vperm.slane %v151, 0
    %v154 = vperm.slane %v151, 1
    %v155 = vperm.slane %v151, 2
    %v156 = vperm.slane %v151, 3
    %vm161 = vcmp.eq.f32.partialorder %v88, %v153
    %vm162 = vcmp.eq.f32.partialorder %v108, %v154
    %vm163 = vcmp.eq.f32.partialorder %v128, %v155
    %vm164 = vcmp.eq.f32.partialorder %v148, %v156
    %v165 = vsel %vm161, 1.0, 0.0
    %v166 = vsel %vm162, 1.0, 0.0
    %v167 = vsel %vm163, 1.0, 0.0
    %v168 = vsel %vm164, 1.0, 0.0
    %v169 = vld [vmem:[%s1] sm:$0x3]
    %v170 = vcvt.s32.f32 %v169
    %v171 = vld [vmem:[#allocation2 + $0x40] sm:$0xff]
    %v172 = vld [vmem:[#allocation2 + $0x48] sm:$0xff]
    %vm173 = vcmask 64512
    %v175 = vsel %vm173, %v170, 0
    %177 = vmatpush.msra.mxu0 0.0
    %178 = vmatpush.msra.mxu0 0.0
    %179 = vmatpush.msra.mxu0 0.0
    %180 = vmatpush.msra.mxu0 0.0
    %181 = vmatpush.msra.mxu0 0.0
    %182 = vmatpush.msra.mxu0 0.0
    %183 = vmatpush.msra.mxu0 0.0
    %184 = vmatpush.msra.mxu0 0.0
    %185 = vmatpush.msra.mxu0 0.0
    %186 = vmatpush.msra.mxu0 0.0
    %187 = vmatpush.msra.mxu0 0.0
    %188 = vmatpush.msra.mxu0 0.0
    %189 = vmatpush.msra.mxu0 0.0
    %190 = vmatpush.msra.mxu0 0.0
    %191 = vmatpush.msra.mxu0 0.0
    %192 = vmatpush.msra.mxu0 %v171
    %193 = vmatmul.f32.gmra.mxu0 %v175
    %v194 = vpop.f32.mrf.mxu0
    %v195 = vadd.f32 0.0, %v194
    %196 = vdwg.mxu0
    %197 = vmatpush.msra.mxu0 0.0
    %198 = vmatpush.msra.mxu0 0.0
    %199 = vmatpush.msra.mxu0 0.0
    %200 = vmatpush.msra.mxu0 0.0
    %201 = vmatpush.msra.mxu0 0.0
    %202 = vmatpush.msra.mxu0 0.0
    %203 = vmatpush.msra.mxu0 0.0
    %204 = vmatpush.msra.mxu0 0.0
    %205 = vmatpush.msra.mxu0 0.0
    %206 = vmatpush.msra.mxu0 0.0
    %207 = vmatpush.msra.mxu0 0.0
    %208 = vmatpush.msra.mxu0 0.0
    %209 = vmatpush.msra.mxu0 0.0
    %210 = vmatpush.msra.mxu0 0.0
    %211 = vmatpush.msra.mxu0 0.0
    %212 = vmatpush.msra.mxu0 %v172
    %213 = vmatmul.f32.gmra.mxu0 %v175
    %v214 = vpop.f32.mrf.mxu0
    %v215 = vadd.f32 0.0, %v214
    %216 = vdwg.mxu0
    %s217 = scalar_lea.vmem [#allocation2], 97
    %v218 = vld [vmem:[%s217] ss:$8 sm:$0x3]
    %v220 = vperm.slane %v218, 0
    %v221 = vperm.slane %v218, 1
    %vm224 = vcmp.eq.f32.partialorder %v195, %v220
    %vm225 = vcmp.eq.f32.partialorder %v215, %v221
    %v226 = vsel %vm224, 1.0, 0.0
    %v227 = vsel %vm225, 1.0, 0.0
    %v228 = vpack.c.bf16 %v165, %v165
    %v229 = vpack.c.bf16 %v166, %v166
    %v230 = vpack.c.bf16 %v167, %v167
    %v231 = vpack.c.bf16 %v168, %v168
    %v232 = vld [vmem:[%s3] sm:$0xff]
    %v233 = vld [vmem:[%s3 + $0x8] sm:$0xff]
    %v234 = vld [vmem:[%s3 + $0x10] sm:$0xff]
    %v235 = vld [vmem:[%s3 + $0x18] sm:$0xff]
    %v236 = vld [vmem:[%s3 + $0x20] sm:$0xff]
    %v237 = vld [vmem:[%s3 + $0x28] sm:$0xff]
    %v238 = vld [vmem:[%s3 + $0x30] sm:$0xff]
    %v239 = vld [vmem:[%s3 + $0x38] sm:$0xff]
    %v240 = vld [vmem:[%s3 + $0x40] sm:$0xff]
    %v241 = vld [vmem:[%s3 + $0x48] sm:$0xff]
    %v242 = vld [vmem:[%s3 + $0x50] sm:$0xff]
    %v243 = vld [vmem:[%s3 + $0x58] sm:$0xff]
    %v244 = vld [vmem:[%s3 + $0x60] sm:$0xff]
    %v245 = vld [vmem:[%s3 + $0x68] sm:$0xff]
    %v246 = vld [vmem:[%s3 + $0x70] sm:$0xff]
    %v247 = vld [vmem:[%s3 + $0x78] sm:$0xff]
    %v248 = vld [vmem:[%s3 + $0x80] sm:$0xff]
    %v249 = vld [vmem:[%s3 + $0x88] sm:$0xff]
    %v250 = vld [vmem:[%s3 + $0x90] sm:$0xff]
    %v251 = vld [vmem:[%s3 + $0x98] sm:$0xff]
    %v252 = vld [vmem:[%s3 + $0xa0] sm:$0xff]
    %v253 = vld [vmem:[%s3 + $0xa8] sm:$0xff]
    %v254 = vld [vmem:[%s3 + $0xb0] sm:$0xff]
    %v255 = vld [vmem:[%s3 + $0xb8] sm:$0xff]
    %v256 = vld [vmem:[%s3 + $0xc0] sm:$0xff]
    %v257 = vld [vmem:[%s3 + $0xc8] sm:$0xff]
    %v258 = vld [vmem:[%s3 + $0xd0] sm:$0xff]
    %v259 = vld [vmem:[%s3 + $0xd8] sm:$0xff]
    %v260 = vld [vmem:[%s3 + $0xe0] sm:$0xff]
    %v261 = vld [vmem:[%s3 + $0xe8] sm:$0xff]
    %v262 = vld [vmem:[%s3 + $0xf0] sm:$0xff]
    %v263 = vld [vmem:[%s3 + $0xf8] sm:$0xff]
    %v264 = vld [vmem:[%s3 + $0x100] sm:$0xff]
    %v265 = vld [vmem:[%s3 + $0x108] sm:$0xff]
    %v266 = vld [vmem:[%s3 + $0x110] sm:$0xff]
    %v267 = vld [vmem:[%s3 + $0x118] sm:$0xff]
    %v268 = vld [vmem:[%s3 + $0x120] sm:$0xff]
    %v269 = vld [vmem:[%s3 + $0x128] sm:$0xff]
    %v270 = vld [vmem:[%s3 + $0x130] sm:$0xff]
    %v271 = vld [vmem:[%s3 + $0x138] sm:$0xff]
    %v272 = vld [vmem:[%s3 + $0x140] sm:$0xff]
    %v273 = vld [vmem:[%s3 + $0x148] sm:$0xff]
    %v274 = vld [vmem:[%s3 + $0x150] sm:$0xff]
    %v275 = vld [vmem:[%s3 + $0x158] sm:$0xff]
    %v276 = vld [vmem:[%s3 + $0x160] sm:$0xff]
    %v277 = vld [vmem:[%s3 + $0x168] sm:$0xff]
    %v278 = vld [vmem:[%s3 + $0x170] sm:$0xff]
    %v279 = vld [vmem:[%s3 + $0x178] sm:$0xff]
    %v280 = vld [vmem:[%s3 + $0x180] sm:$0xff]
    %v281 = vld [vmem:[%s3 + $0x188] sm:$0xff]
    %v282 = vld [vmem:[%s3 + $0x190] sm:$0xff]
    %v283 = vld [vmem:[%s3 + $0x198] sm:$0xff]
    %v284 = vld [vmem:[%s3 + $0x1a0] sm:$0xff]
    %v285 = vld [vmem:[%s3 + $0x1a8] sm:$0xff]
    %v286 = vld [vmem:[%s3 + $0x1b0] sm:$0xff]
    %v287 = vld [vmem:[%s3 + $0x1b8] sm:$0xff]
    %v288 = vld [vmem:[%s3 + $0x1c0] sm:$0xff]
    %v289 = vld [vmem:[%s3 + $0x1c8] sm:$0xff]
    %v290 = vld [vmem:[%s3 + $0x1d0] sm:$0xff]
    %v291 = vld [vmem:[%s3 + $0x1d8] sm:$0xff]
    %s292 = scalar_lea.vmem [#allocation2], 100
    %v293 = vld [vmem:[%s292] ss:$8 sm:$0x3]
    %v295 = vperm.slane %v293, 0
    %v296 = vperm.slane %v293, 1
    %v359 = vunpack.c.l.b16 %v232
    %v360 = vunpack.c.h.b16 %v232
    %v361 = vunpack.c.l.b16 %v233
    %v362 = vunpack.c.h.b16 %v233
    %v363 = vunpack.c.l.b16 %v234
    %v364 = vunpack.c.h.b16 %v234
    %v365 = vunpack.c.l.b16 %v235
    %v366 = vunpack.c.h.b16 %v235
    %v367 = vunpack.c.l.b16 %v236
    %v368 = vunpack.c.h.b16 %v236
    %v369 = vunpack.c.l.b16 %v237
    %v370 = vunpack.c.h.b16 %v237
    %v371 = vunpack.c.l.b16 %v238
    %v372 = vunpack.c.h.b16 %v238
    %v373 = vunpack.c.l.b16 %v239
    %v374 = vunpack.c.h.b16 %v239
    %v375 = vunpack.c.l.b16 %v240
    %v376 = vunpack.c.h.b16 %v240
    %v377 = vunpack.c.l.b16 %v241
    %v378 = vunpack.c.h.b16 %v241
    %v379 = vunpack.c.l.b16 %v242
    %v380 = vunpack.c.h.b16 %v242
    %v381 = vunpack.c.l.b16 %v243
    %v382 = vunpack.c.h.b16 %v243
    %v383 = vunpack.c.l.b16 %v244
    %v384 = vunpack.c.h.b16 %v244
    %v385 = vunpack.c.l.b16 %v245
    %v386 = vunpack.c.h.b16 %v245
    %v387 = vunpack.c.l.b16 %v246
    %v388 = vunpack.c.h.b16 %v246
    %v389 = vunpack.c.l.b16 %v247
    %v390 = vunpack.c.h.b16 %v247
    %v391 = vunpack.c.l.b16 %v248
    %v392 = vunpack.c.h.b16 %v248
    %v393 = vunpack.c.l.b16 %v249
    %v394 = vunpack.c.h.b16 %v249
    %v395 = vunpack.c.l.b16 %v250
    %v396 = vunpack.c.h.b16 %v250
    %v397 = vunpack.c.l.b16 %v251
    %v398 = vunpack.c.h.b16 %v251
    %v399 = vunpack.c.l.b16 %v252
    %v400 = vunpack.c.h.b16 %v252
    %v401 = vunpack.c.l.b16 %v253
    %v402 = vunpack.c.h.b16 %v253
    %v403 = vunpack.c.l.b16 %v254
    %v404 = vunpack.c.h.b16 %v254
    %v405 = vunpack.c.l.b16 %v255
    %v406 = vunpack.c.h.b16 %v255
    %v407 = vunpack.c.l.b16 %v256
    %v408 = vunpack.c.h.b16 %v256
    %v409 = vunpack.c.l.b16 %v257
    %v410 = vunpack.c.h.b16 %v257
    %v411 = vunpack.c.l.b16 %v258
    %v412 = vunpack.c.h.b16 %v258
    %v413 = vunpack.c.l.b16 %v259
    %v414 = vunpack.c.h.b16 %v259
    %v415 = vunpack.c.l.b16 %v260
    %v416 = vunpack.c.h.b16 %v260
    %v417 = vunpack.c.l.b16 %v261
    %v418 = vunpack.c.h.b16 %v261
    %v419 = vunpack.c.l.b16 %v262
    %v420 = vunpack.c.h.b16 %v262
    %v421 = vunpack.c.l.b16 %v263
    %v422 = vunpack.c.h.b16 %v263
    %v423 = vunpack.c.l.b16 %v264
    %v424 = vunpack.c.h.b16 %v264
    %v425 = vunpack.c.l.b16 %v265
    %v426 = vunpack.c.h.b16 %v265
    %v427 = vunpack.c.l.b16 %v266
    %v428 = vunpack.c.h.b16 %v266
    %v429 = vunpack.c.l.b16 %v267
    %v430 = vunpack.c.h.b16 %v267
    %v431 = vunpack.c.l.b16 %v268
    %v432 = vunpack.c.h.b16 %v268
    %v433 = vunpack.c.l.b16 %v269
    %v434 = vunpack.c.h.b16 %v269
    %v435 = vunpack.c.l.b16 %v270
    %v436 = vunpack.c.h.b16 %v270
    %v437 = vunpack.c.l.b16 %v271
    %v438 = vunpack.c.h.b16 %v271
    %v439 = vunpack.c.l.b16 %v272
    %v440 = vunpack.c.h.b16 %v272
    %v441 = vunpack.c.l.b16 %v273
    %v442 = vunpack.c.h.b16 %v273
    %v443 = vunpack.c.l.b16 %v274
    %v444 = vunpack.c.h.b16 %v274
    %v445 = vunpack.c.l.b16 %v275
    %v446 = vunpack.c.h.b16 %v275
    %v447 = vunpack.c.l.b16 %v276
    %v448 = vunpack.c.h.b16 %v276
    %v449 = vunpack.c.l.b16 %v277
    %v450 = vunpack.c.h.b16 %v277
    %v451 = vunpack.c.l.b16 %v278
    %v452 = vunpack.c.h.b16 %v278
    %v453 = vunpack.c.l.b16 %v279
    %v454 = vunpack.c.h.b16 %v279
    %v455 = vunpack.c.l.b16 %v280
    %v456 = vunpack.c.h.b16 %v280
    %v457 = vunpack.c.l.b16 %v281
    %v458 = vunpack.c.h.b16 %v281
    %v459 = vunpack.c.l.b16 %v282
    %v460 = vunpack.c.h.b16 %v282
    %v461 = vunpack.c.l.b16 %v283
    %v462 = vunpack.c.h.b16 %v283
    %v463 = vunpack.c.l.b16 %v284
    %v464 = vunpack.c.h.b16 %v284
    %v465 = vunpack.c.l.b16 %v285
    %v466 = vunpack.c.h.b16 %v285
    %v467 = vunpack.c.l.b16 %v286
    %v468 = vunpack.c.h.b16 %v286
    %v469 = vunpack.c.l.b16 %v287
    %v470 = vunpack.c.h.b16 %v287
    %v471 = vunpack.c.l.b16 %v288
    %v472 = vunpack.c.h.b16 %v288
    %v473 = vunpack.c.l.b16 %v289
    %v474 = vunpack.c.h.b16 %v289
    %v475 = vunpack.c.l.b16 %v290
    %v476 = vunpack.c.h.b16 %v290
    %v477 = vunpack.c.l.b16 %v291
    %v478 = vunpack.c.h.b16 %v291
    %v479 = vpack.c.b16 %v361, %v359
    %v480 = vpack.c.b16 %v362, %v360
    %v481 = vpack.c.b16 %v365, %v363
    %v482 = vpack.c.b16 %v366, %v364
    %v483 = vpack.c.b16 %v369, %v367
    %v484 = vpack.c.b16 %v370, %v368
    %v485 = vpack.c.b16 %v373, %v371
    %v486 = vpack.c.b16 %v374, %v372
    %v487 = vpack.c.b16 %v377, %v375
    %v488 = vpack.c.b16 %v378, %v376
    %v489 = vpack.c.b16 %v381, %v379
    %v490 = vpack.c.b16 %v382, %v380
    %v491 = vpack.c.b16 %v385, %v383
    %v492 = vpack.c.b16 %v386, %v384
    %v493 = vpack.c.b16 %v389, %v387
    %v494 = vpack.c.b16 %v390, %v388
    %v495 = vpack.c.b16 %v393, %v391
    %v496 = vpack.c.b16 %v394, %v392
    %v497 = vpack.c.b16 %v397, %v395
    %v498 = vpack.c.b16 %v398, %v396
    %v499 = vpack.c.b16 %v401, %v399
    %v500 = vpack.c.b16 %v402, %v400
    %v501 = vpack.c.b16 %v405, %v403
    %v502 = vpack.c.b16 %v406, %v404
    %v503 = vpack.c.b16 %v409, %v407
    %v504 = vpack.c.b16 %v410, %v408
    %v505 = vpack.c.b16 %v413, %v411
    %v506 = vpack.c.b16 %v414, %v412
    %v507 = vpack.c.b16 %v417, %v415
    %v508 = vpack.c.b16 %v418, %v416
    %v509 = vpack.c.b16 %v421, %v419
    %v510 = vpack.c.b16 %v422, %v420
    %v511 = vpack.c.b16 %v425, %v423
    %v512 = vpack.c.b16 %v426, %v424
    %v513 = vpack.c.b16 %v429, %v427
    %v514 = vpack.c.b16 %v430, %v428
    %v515 = vpack.c.b16 %v433, %v431
    %v516 = vpack.c.b16 %v434, %v432
    %v517 = vpack.c.b16 %v437, %v435
    %v518 = vpack.c.b16 %v438, %v436
    %v519 = vpack.c.b16 %v441, %v439
    %v520 = vpack.c.b16 %v442, %v440
    %v521 = vpack.c.b16 %v445, %v443
    %v522 = vpack.c.b16 %v446, %v444
    %v523 = vpack.c.b16 %v449, %v447
    %v524 = vpack.c.b16 %v450, %v448
    %v525 = vpack.c.b16 %v453, %v451
    %v526 = vpack.c.b16 %v454, %v452
    %v527 = vpack.c.b16 %v457, %v455
    %v528 = vpack.c.b16 %v458, %v456
    %v529 = vpack.c.b16 %v461, %v459
    %v530 = vpack.c.b16 %v462, %v460
    %v531 = vpack.c.b16 %v465, %v463
    %v532 = vpack.c.b16 %v466, %v464
    %v533 = vpack.c.b16 %v469, %v467
    %v534 = vpack.c.b16 %v470, %v468
    %v535 = vpack.c.b16 %v473, %v471
    %v536 = vpack.c.b16 %v474, %v472
    %v537 = vpack.c.b16 %v477, %v475
    %v538 = vpack.c.b16 %v478, %v476
    %vm599 = vcmask 785408
    %v601 = vsel %vm599, %v231, 0
    %603 = vmatpush.bf16.msra.mxu0 %v493
    %604 = vmatpush.bf16.msra.mxu0 %v491
    %605 = vmatpush.bf16.msra.mxu0 %v489
    %606 = vmatpush.bf16.msra.mxu0 %v487
    %607 = vmatpush.bf16.msra.mxu0 %v485
    %608 = vmatpush.bf16.msra.mxu0 %v483
    %609 = vmatpush.bf16.msra.mxu0 %v481
    %610 = vmatpush.bf16.msra.mxu0 %v479
    %611 = vmatmul.bf16.gmra.mxu0 %v228
    %v612 = vpop.f32.mrf.mxu0
    %v613 = vadd.f32 %v295, %v612
    %v614 = vpop.f32.mrf.mxu0
    %615 = vdwg.mxu0
    %616 = vmatpush.bf16.msra.mxu0 %v509
    %617 = vmatpush.bf16.msra.mxu0 %v507
    %618 = vmatpush.bf16.msra.mxu0 %v505
    %619 = vmatpush.bf16.msra.mxu0 %v503
    %620 = vmatpush.bf16.msra.mxu0 %v501
    %621 = vmatpush.bf16.msra.mxu0 %v499
    %622 = vmatpush.bf16.msra.mxu0 %v497
    %623 = vmatpush.bf16.msra.mxu0 %v495
    %624 = vmatmul.bf16.gmra.mxu0 %v229
    %v625 = vpop.f32.mrf.mxu0
    %v626 = vadd.f32 %v613, %v625
    %v627 = vpop.f32.mrf.mxu0
    %628 = vdwg.mxu0
    %629 = vmatpush.bf16.msra.mxu0 %v525
    %630 = vmatpush.bf16.msra.mxu0 %v523
    %631 = vmatpush.bf16.msra.mxu0 %v521
    %632 = vmatpush.bf16.msra.mxu0 %v519
    %633 = vmatpush.bf16.msra.mxu0 %v517
    %634 = vmatpush.bf16.msra.mxu0 %v515
    %635 = vmatpush.bf16.msra.mxu0 %v513
    %636 = vmatpush.bf16.msra.mxu0 %v511
    %637 = vmatmul.bf16.gmra.mxu0 %v230
    %v638 = vpop.f32.mrf.mxu0
    %v639 = vadd.f32 %v626, %v638
    %v640 = vpop.f32.mrf.mxu0
    %641 = vdwg.mxu0
    %642 = vmatpush.bf16.msra.mxu0 0
    %643 = vmatpush.bf16.msra.mxu0 0
    %644 = vmatpush.bf16.msra.mxu0 %v537
    %645 = vmatpush.bf16.msra.mxu0 %v535
    %646 = vmatpush.bf16.msra.mxu0 %v533
    %647 = vmatpush.bf16.msra.mxu0 %v531
    %648 = vmatpush.bf16.msra.mxu0 %v529
    %649 = vmatpush.bf16.msra.mxu0 %v527
    %650 = vmatmul.bf16.gmra.mxu0 %v601
    %v651 = vpop.f32.mrf.mxu0
    %v652 = vadd.f32 %v639, %v651
    %v653 = vpop.f32.mrf.mxu0
    %654 = vdwg.mxu0
    %655 = vmatpush.bf16.msra.mxu0 %v494
    %656 = vmatpush.bf16.msra.mxu0 %v492
    %657 = vmatpush.bf16.msra.mxu0 %v490
    %658 = vmatpush.bf16.msra.mxu0 %v488
    %659 = vmatpush.bf16.msra.mxu0 %v486
    %660 = vmatpush.bf16.msra.mxu0 %v484
    %661 = vmatpush.bf16.msra.mxu0 %v482
    %662 = vmatpush.bf16.msra.mxu0 %v480
    %663 = vmatmul.bf16.gmra.mxu0 %v228
    %v664 = vpop.f32.mrf.mxu0
    %v665 = vadd.f32 %v296, %v664
    %v666 = vpop.f32.mrf.mxu0
    %667 = vdwg.mxu0
    %668 = vmatpush.bf16.msra.mxu0 %v510
    %669 = vmatpush.bf16.msra.mxu0 %v508
    %670 = vmatpush.bf16.msra.mxu0 %v506
    %671 = vmatpush.bf16.msra.mxu0 %v504
    %672 = vmatpush.bf16.msra.mxu0 %v502
    %673 = vmatpush.bf16.msra.mxu0 %v500
    %674 = vmatpush.bf16.msra.mxu0 %v498
    %675 = vmatpush.bf16.msra.mxu0 %v496
    %676 = vmatmul.bf16.gmra.mxu0 %v229
    %v677 = vpop.f32.mrf.mxu0
    %v678 = vadd.f32 %v665, %v677
    %v679 = vpop.f32.mrf.mxu0
    %680 = vdwg.mxu0
    %681 = vmatpush.bf16.msra.mxu0 %v526
    %682 = vmatpush.bf16.msra.mxu0 %v524
    %683 = vmatpush.bf16.msra.mxu0 %v522
    %684 = vmatpush.bf16.msra.mxu0 %v520
    %685 = vmatpush.bf16.msra.mxu0 %v518
    %686 = vmatpush.bf16.msra.mxu0 %v516
    %687 = vmatpush.bf16.msra.mxu0 %v514
    %688 = vmatpush.bf16.msra.mxu0 %v512
    %689 = vmatmul.bf16.gmra.mxu0 %v230
    %v690 = vpop.f32.mrf.mxu0
    %v691 = vadd.f32 %v678, %v690
    %v692 = vpop.f32.mrf.mxu0
    %693 = vdwg.mxu0
    %694 = vmatpush.bf16.msra.mxu0 0
    %695 = vmatpush.bf16.msra.mxu0 0
    %696 = vmatpush.bf16.msra.mxu0 %v538
    %697 = vmatpush.bf16.msra.mxu0 %v536
    %698 = vmatpush.bf16.msra.mxu0 %v534
    %699 = vmatpush.bf16.msra.mxu0 %v532
    %700 = vmatpush.bf16.msra.mxu0 %v530
    %701 = vmatpush.bf16.msra.mxu0 %v528
    %702 = vmatmul.bf16.gmra.mxu0 %v601
    %v703 = vpop.f32.mrf.mxu0
    %v704 = vadd.f32 %v691, %v703
    %v705 = vpop.f32.mrf.mxu0
    %706 = vdwg.mxu0
    %vm707 = vcmp.gt.f32.partialorder %v652, 0.0
    %vm708 = vcmp.gt.f32.partialorder %v704, 0.0
    %v709 = vmin.f32 %v652, 0.0
    %v710 = vmin.f32 %v704, 0.0
    %v711 = vmul.f32 %v709, 1.442695
    %v712 = vpow.pop %v711
    %v713 = vmul.f32 %v710, 1.442695
    %v714 = vpow.pop %v713
    %v715 = vsub.f32 %v712, 1.0
    %v716 = vsub.f32 %v714, 1.0
    %v717 = vmul.f32 %v715, 1.6732632
    %v718 = vmul.f32 %v716, 1.6732632
    %v719 = vsel %vm707, %v652, %v717
    %v720 = vsel %vm708, %v704, %v718
    %v721 = vmul.f32 %v719, 1.050701
    %v722 = vmul.f32 %v720, 1.050701
    %s723 = scalar_lea.vmem [#allocation2], 98
    %v724 = vld [vmem:[%s723] ss:$8 sm:$0x3]
    %vm725 = vcmp.gt.f32.partialorder %v724, 0.5
    %726 = vrot.lane.b32.xlu0 %v721, 16
    %v727 = vpop.permute.xlu0 %726
    %728 = vrot.lane.b32.xlu0 %v722, 16
    %v729 = vpop.permute.xlu0 %728
    %v730 = vlaneseq
    %v731 = vand.u32 %v730, 127
    %vm732 = vcmp.lt.s32.totalorder %v731, 16
    %v733 = vsel %vm732, %v727, %v729
    %v734 = vsel %vm732, %v729, %v727
    %v735 = vsel %vm725, 1, 0
    %v736 = vperm.slane %v735, 0
    %v737 = vperm.slane %v735, 1
    %vm738 = vcmp.eq.s32.totalorder %v736, 1
    %vm739 = vcmp.eq.s32.totalorder %v737, 1
    %v740 = vsel %vm738, %v734, -inf
    %v741 = vsel %vm739, %v733, -inf
    %v742 = vmax.f32 %v721, %v740
    %v743 = vmax.f32 %v722, %v741
    %s744 = scalar_lea.vmem [#allocation2], 99
    %v745 = vld [vmem:[%s744] ss:$8 sm:$0x3]
    %vm746 = vcmp.gt.f32.partialorder %v745, 0.5
    %747 = vrot.lane.b32.xlu0 %v721, 112
    %v748 = vpop.permute.xlu0 %747
    %749 = vrot.lane.b32.xlu0 %v722, 112
    %v750 = vpop.permute.xlu0 %749
    %vm751 = vcmp.lt.s32.totalorder %v731, 112
    %v752 = vsel %vm751, %v748, %v750
    %v753 = vsel %vm751, %v750, %v748
    %v754 = vsel %vm746, 1, 0
    %v755 = vperm.slane %v754, 0
    %v756 = vperm.slane %v754, 1
    %vm757 = vcmp.eq.s32.totalorder %v755, 1
    %vm758 = vcmp.eq.s32.totalorder %v756, 1
    %v759 = vsel %vm757, %v752, -inf
    %v760 = vsel %vm758, %v753, -inf
    %v761 = vmax.f32 %v742, %v759
    %v762 = vmax.f32 %v743, %v760
    %v763 = vld [vmem:[%s4] sm:$0xf]
    %v764 = vld [vmem:[%s4 + $0x4] sm:$0xf]
    %v765 = vld [vmem:[%s4 + $0x8] sm:$0xf]
    %v766 = vld [vmem:[%s4 + $0xc] sm:$0xf]
    %v767 = vld [vmem:[%s4 + $0x10] sm:$0xf]
    %v768 = vld [vmem:[%s4 + $0x14] sm:$0xf]
    %v769 = vld [vmem:[%s4 + $0x18] sm:$0xf]
    %v770 = vld [vmem:[%s4 + $0x1c] sm:$0xf]
    %v771 = vld [vmem:[%s4 + $0x20] sm:$0xf]
    %v772 = vld [vmem:[%s4 + $0x24] sm:$0xf]
    %v773 = vld [vmem:[%s4 + $0x28] sm:$0xf]
    %v774 = vld [vmem:[%s4 + $0x2c] sm:$0xf]
    %v775 = vld [vmem:[%s4 + $0x30] sm:$0xf]
    %v776 = vld [vmem:[%s4 + $0x34] sm:$0xf]
    %v777 = vld [vmem:[%s4 + $0x38] sm:$0xf]
    %v778 = vld [vmem:[%s4 + $0x3c] sm:$0xf]
    %v779 = vld [vmem:[%s4 + $0x40] sm:$0xf]
    %v780 = vld [vmem:[%s4 + $0x44] sm:$0xf]
    %v781 = vld [vmem:[%s4 + $0x48] sm:$0xf]
    %v782 = vld [vmem:[%s4 + $0x4c] sm:$0xf]
    %v783 = vld [vmem:[%s4 + $0x50] sm:$0xf]
    %v784 = vld [vmem:[%s4 + $0x54] sm:$0xf]
    %v785 = vld [vmem:[%s4 + $0x58] sm:$0xf]
    %v786 = vld [vmem:[%s4 + $0x5c] sm:$0xf]
    %v787 = vld [vmem:[%s4 + $0x60] sm:$0xf]
    %v788 = vld [vmem:[%s4 + $0x64] sm:$0xf]
    %v789 = vld [vmem:[%s4 + $0x68] sm:$0xf]
    %v790 = vld [vmem:[%s4 + $0x6c] sm:$0xf]
    %v791 = vld [vmem:[%s4 + $0x70] sm:$0xf]
    %v792 = vld [vmem:[%s4 + $0x74] sm:$0xf]
    %v793 = vld [vmem:[%s4 + $0x78] sm:$0xf]
    %v794 = vld [vmem:[%s4 + $0x7c] sm:$0xf]
    %v795 = vunpack.c.l.bf16 %v763
    %v796 = vunpack.c.l.bf16 %v764
    %v797 = vunpack.c.l.bf16 %v765
    %v798 = vunpack.c.l.bf16 %v766
    %v799 = vunpack.c.l.bf16 %v767
    %v800 = vunpack.c.l.bf16 %v768
    %v801 = vunpack.c.l.bf16 %v769
    %v802 = vunpack.c.l.bf16 %v770
    %v803 = vunpack.c.l.bf16 %v771
    %v804 = vunpack.c.l.bf16 %v772
    %v805 = vunpack.c.l.bf16 %v773
    %v806 = vunpack.c.l.bf16 %v774
    %v807 = vunpack.c.l.bf16 %v775
    %v808 = vunpack.c.l.bf16 %v776
    %v809 = vunpack.c.l.bf16 %v777
    %v810 = vunpack.c.l.bf16 %v778
    %v811 = vunpack.c.l.bf16 %v779
    %v812 = vunpack.c.l.bf16 %v780
    %v813 = vunpack.c.l.bf16 %v781
    %v814 = vunpack.c.l.bf16 %v782
    %v815 = vunpack.c.l.bf16 %v783
    %v816 = vunpack.c.l.bf16 %v784
    %v817 = vunpack.c.l.bf16 %v785
    %v818 = vunpack.c.l.bf16 %v786
    %v819 = vunpack.c.l.bf16 %v787
    %v820 = vunpack.c.l.bf16 %v788
    %v821 = vunpack.c.l.bf16 %v789
    %v822 = vunpack.c.l.bf16 %v790
    %v823 = vunpack.c.l.bf16 %v791
    %v824 = vunpack.c.l.bf16 %v792
    %v825 = vunpack.c.l.bf16 %v793
    %v826 = vunpack.c.l.bf16 %v794
    %v827 = vld [vmem:[#allocation2 + $0x65] ss:$0 sm:$0xff]
    %828 = vmatpush.msra.mxu0 %v810
    %829 = vmatpush.msra.mxu0 %v809
    %830 = vmatpush.msra.mxu0 %v808
    %831 = vmatpush.msra.mxu0 %v807
    %832 = vmatpush.msra.mxu0 %v806
    %833 = vmatpush.msra.mxu0 %v805
    %834 = vmatpush.msra.mxu0 %v804
    %835 = vmatpush.msra.mxu0 %v803
    %836 = vmatpush.msra.mxu0 %v802
    %837 = vmatpush.msra.mxu0 %v801
    %838 = vmatpush.msra.mxu0 %v800
    %839 = vmatpush.msra.mxu0 %v799
    %840 = vmatpush.msra.mxu0 %v798
    %841 = vmatpush.msra.mxu0 %v797
    %842 = vmatpush.msra.mxu0 %v796
    %843 = vmatpush.msra.mxu0 %v795
    %844 = vmatmul.f32.gmra.mxu0 %v761
    %v845 = vpop.f32.mrf.mxu0
    %v846 = vadd.f32 %v827, %v845
    %847 = vdwg.mxu0
    %848 = vmatpush.msra.mxu0 %v826
    %849 = vmatpush.msra.mxu0 %v825
    %850 = vmatpush.msra.mxu0 %v824
    %851 = vmatpush.msra.mxu0 %v823
    %852 = vmatpush.msra.mxu0 %v822
    %853 = vmatpush.msra.mxu0 %v821
    %854 = vmatpush.msra.mxu0 %v820
    %855 = vmatpush.msra.mxu0 %v819
    %856 = vmatpush.msra.mxu0 %v818
    %857 = vmatpush.msra.mxu0 %v817
    %858 = vmatpush.msra.mxu0 %v816
    %859 = vmatpush.msra.mxu0 %v815
    %860 = vmatpush.msra.mxu0 %v814
    %861 = vmatpush.msra.mxu0 %v813
    %862 = vmatpush.msra.mxu0 %v812
    %863 = vmatpush.msra.mxu0 %v811
    %864 = vmatmul.f32.gmra.mxu0 %v762
    %v865 = vpop.f32.mrf.mxu0
    %v866 = vadd.f32 %v846, %v865
    %867 = vdwg.mxu0
    %v868 = vmax.f32 %v866, 0.0
    %v869 = vld [vmem:[%s4 + $0x80] sm:$0xf]
    %v870 = vld [vmem:[%s4 + $0x84] sm:$0xf]
    %v871 = vld [vmem:[%s4 + $0x88] sm:$0xf]
    %v872 = vld [vmem:[%s4 + $0x8c] sm:$0xf]
    %v873 = vld [vmem:[%s4 + $0x90] sm:$0xf]
    %v874 = vld [vmem:[%s4 + $0x94] sm:$0xf]
    %v875 = vld [vmem:[%s4 + $0x98] sm:$0xf]
    %v876 = vld [vmem:[%s4 + $0x9c] sm:$0xf]
    %v877 = vunpack.c.l.bf16 %v869
    %v878 = vunpack.c.l.bf16 %v870
    %v879 = vunpack.c.l.bf16 %v871
    %v880 = vunpack.c.l.bf16 %v872
    %v881 = vunpack.c.l.bf16 %v873
    %v882 = vunpack.c.l.bf16 %v874
    %v883 = vunpack.c.l.bf16 %v875
    %v884 = vunpack.c.l.bf16 %v876
    %v885 = vld [vmem:[#allocation2 + $0x66] ss:$0 sm:$0xff]
    %vm886 = vcmask 523264
    %v888 = vsel %vm886, %v868, 0
    %890 = vmatpush.msra.mxu0 0.0
    %891 = vmatpush.msra.mxu0 0.0
    %892 = vmatpush.msra.mxu0 0.0
    %893 = vmatpush.msra.mxu0 0.0
    %894 = vmatpush.msra.mxu0 0.0
    %895 = vmatpush.msra.mxu0 0.0
    %896 = vmatpush.msra.mxu0 0.0
    %897 = vmatpush.msra.mxu0 0.0
    %898 = vmatpush.msra.mxu0 %v884
    %899 = vmatpush.msra.mxu0 %v883
    %900 = vmatpush.msra.mxu0 %v882
    %901 = vmatpush.msra.mxu0 %v881
    %902 = vmatpush.msra.mxu0 %v880
    %903 = vmatpush.msra.mxu0 %v879
    %904 = vmatpush.msra.mxu0 %v878
    %905 = vmatpush.msra.mxu0 %v877
    %906 = vmatmul.f32.gmra.mxu0 %v888
    %v907 = vpop.f32.mrf.mxu0
    %v908 = vadd.f32 %v885, %v907
    %909 = vdwg.mxu0
    %v910 = vld [vmem:[%s4 + $0xb0] sm:$0xf]
    %v911 = vld [vmem:[%s4 + $0xb4] sm:$0xf]
    %v912 = vld [vmem:[%s4 + $0xb8] sm:$0xf]
    %v913 = vld [vmem:[%s4 + $0xbc] sm:$0xf]
    %v914 = vld [vmem:[%s4 + $0xc0] sm:$0xf]
    %v915 = vld [vmem:[%s4 + $0xc4] sm:$0xf]
    %v916 = vld [vmem:[%s4 + $0xc8] sm:$0xf]
    %v917 = vld [vmem:[%s4 + $0xcc] sm:$0xf]
    %v918 = vld [vmem:[%s4 + $0xd0] sm:$0xf]
    %v919 = vld [vmem:[%s4 + $0xd4] sm:$0xf]
    %v920 = vld [vmem:[%s4 + $0xd8] sm:$0xf]
    %v921 = vld [vmem:[%s4 + $0xdc] sm:$0xf]
    %v922 = vld [vmem:[%s4 + $0xe0] sm:$0xf]
    %v923 = vld [vmem:[%s4 + $0xe4] sm:$0xf]
    %v924 = vld [vmem:[%s4 + $0xe8] sm:$0xf]
    %v925 = vld [vmem:[%s4 + $0xec] sm:$0xf]
    %v926 = vld [vmem:[%s4 + $0xf0] sm:$0xf]
    %v927 = vld [vmem:[%s4 + $0xf4] sm:$0xf]
    %v928 = vld [vmem:[%s4 + $0xf8] sm:$0xf]
    %v929 = vld [vmem:[%s4 + $0xfc] sm:$0xf]
    %v930 = vunpack.c.l.bf16 %v910
    %v931 = vunpack.c.l.bf16 %v911
    %v932 = vunpack.c.l.bf16 %v912
    %v933 = vunpack.c.l.bf16 %v913
    %v934 = vunpack.c.l.bf16 %v914
    %v935 = vunpack.c.l.bf16 %v915
    %v936 = vunpack.c.l.bf16 %v916
    %v937 = vunpack.c.l.bf16 %v917
    %v938 = vunpack.c.l.bf16 %v918
    %v939 = vunpack.c.l.bf16 %v919
    %v940 = vunpack.c.l.bf16 %v920
    %v941 = vunpack.c.l.bf16 %v921
    %v942 = vunpack.c.l.bf16 %v922
    %v943 = vunpack.c.l.bf16 %v923
    %v944 = vunpack.c.l.bf16 %v924
    %v945 = vunpack.c.l.bf16 %v925
    %v946 = vunpack.c.l.bf16 %v926
    %v947 = vunpack.c.l.bf16 %v927
    %v948 = vunpack.c.l.bf16 %v928
    %v949 = vunpack.c.l.bf16 %v929
    %v950 = vld [vmem:[#allocation2 + $0x81] ss:$0 sm:$0xff]
    %vm951 = vcmask 261120
    %v953 = vsel %vm951, %v227, 0
    %955 = vmatpush.msra.mxu0 %v945
    %956 = vmatpush.msra.mxu0 %v944
    %957 = vmatpush.msra.mxu0 %v943
    %958 = vmatpush.msra.mxu0 %v942
    %959 = vmatpush.msra.mxu0 %v941
    %960 = vmatpush.msra.mxu0 %v940
    %961 = vmatpush.msra.mxu0 %v939
    %962 = vmatpush.msra.mxu0 %v938
    %963 = vmatpush.msra.mxu0 %v937
    %964 = vmatpush.msra.mxu0 %v936
    %965 = vmatpush.msra.mxu0 %v935
    %966 = vmatpush.msra.mxu0 %v934
    %967 = vmatpush.msra.mxu0 %v933
    %968 = vmatpush.msra.mxu0 %v932
    %969 = vmatpush.msra.mxu0 %v931
    %970 = vmatpush.msra.mxu0 %v930
    %971 = vmatmul.f32.gmra.mxu0 %v226
    %v972 = vpop.f32.mrf.mxu0
    %v973 = vadd.f32 %v950, %v972
    %974 = vdwg.mxu0
    %975 = vmatpush.msra.mxu0 0.0
    %976 = vmatpush.msra.mxu0 0.0
    %977 = vmatpush.msra.mxu0 0.0
    %978 = vmatpush.msra.mxu0 0.0
    %979 = vmatpush.msra.mxu0 0.0
    %980 = vmatpush.msra.mxu0 0.0
    %981 = vmatpush.msra.mxu0 0.0
    %982 = vmatpush.msra.mxu0 0.0
    %983 = vmatpush.msra.mxu0 0.0
    %984 = vmatpush.msra.mxu0 0.0
    %985 = vmatpush.msra.mxu0 0.0
    %986 = vmatpush.msra.mxu0 0.0
    %987 = vmatpush.msra.mxu0 %v949
    %988 = vmatpush.msra.mxu0 %v948
    %989 = vmatpush.msra.mxu0 %v947
    %990 = vmatpush.msra.mxu0 %v946
    %991 = vmatmul.f32.gmra.mxu0 %v953
    %v992 = vpop.f32.mrf.mxu0
    %v993 = vadd.f32 %v973, %v992
    %994 = vdwg.mxu0
    %v995 = vmax.f32 %v993, 0.0
    %v996 = vld [vmem:[%s4 + $0x100] sm:$0xf]
    %v997 = vld [vmem:[%s4 + $0x104] sm:$0xf]
    %v998 = vld [vmem:[%s4 + $0x108] sm:$0xf]
    %v999 = vld [vmem:[%s4 + $0x10c] sm:$0xf]
    %v1000 = vld [vmem:[%s4 + $0x110] sm:$0xf]
    %v1001 = vld [vmem:[%s4 + $0x114] sm:$0xf]
    %v1002 = vld [vmem:[%s4 + $0x118] sm:$0xf]
    %v1003 = vld [vmem:[%s4 + $0x11c] sm:$0xf]
    %v1004 = vunpack.c.l.bf16 %v996
    %v1005 = vunpack.c.l.bf16 %v997
    %v1006 = vunpack.c.l.bf16 %v998
    %v1007 = vunpack.c.l.bf16 %v999
    %v1008 = vunpack.c.l.bf16 %v1000
    %v1009 = vunpack.c.l.bf16 %v1001
    %v1010 = vunpack.c.l.bf16 %v1002
    %v1011 = vunpack.c.l.bf16 %v1003
    %v1012 = vld [vmem:[#allocation2 + $0x82] ss:$0 sm:$0xff]
    %v1014 = vsel %vm886, %v995, 0
    %1016 = vmatpush.msra.mxu0 0.0
    %1017 = vmatpush.msra.mxu0 0.0
    %1018 = vmatpush.msra.mxu0 0.0
    %1019 = vmatpush.msra.mxu0 0.0
    %1020 = vmatpush.msra.mxu0 0.0
    %1021 = vmatpush.msra.mxu0 0.0
    %1022 = vmatpush.msra.mxu0 0.0
    %1023 = vmatpush.msra.mxu0 0.0
    %1024 = vmatpush.msra.mxu0 %v1011
    %1025 = vmatpush.msra.mxu0 %v1010
    %1026 = vmatpush.msra.mxu0 %v1009
    %1027 = vmatpush.msra.mxu0 %v1008
    %1028 = vmatpush.msra.mxu0 %v1007
    %1029 = vmatpush.msra.mxu0 %v1006
    %1030 = vmatpush.msra.mxu0 %v1005
    %1031 = vmatpush.msra.mxu0 %v1004
    %1032 = vmatmul.f32.gmra.mxu0 %v1014
    %v1033 = vpop.f32.mrf.mxu0
    %v1034 = vadd.f32 %v1012, %v1033
    %1035 = vdwg.mxu0
    %v1037 = vrot.slane %v1034, 6
    %vm1039 = vcmask 1041408
    %v1040 = vsel %vm1039, %v908, %v1037
    %v1041 = vld [vmem:[%s4 + $0x130] sm:$0xf]
    %v1042 = vld [vmem:[%s4 + $0x134] sm:$0xf]
    %v1043 = vld [vmem:[%s4 + $0x138] sm:$0xf]
    %v1044 = vld [vmem:[%s4 + $0x13c] sm:$0xf]
    %v1045 = vunpack.c.l.bf16 %v1041
    %v1046 = vunpack.c.l.bf16 %v1042
    %v1047 = vunpack.c.l.bf16 %v1043
    %v1048 = vunpack.c.l.bf16 %v1044
    %v1049 = vld [vmem:[#allocation2 + $0x85] ss:$0 sm:$0xff]
    %v1051 = vsel %vm951, %v1040, 0
    %1053 = vmatpush.msra.mxu0 0.0
    %1054 = vmatpush.msra.mxu0 0.0
    %1055 = vmatpush.msra.mxu0 0.0
    %1056 = vmatpush.msra.mxu0 0.0
    %1057 = vmatpush.msra.mxu0 0.0
    %1058 = vmatpush.msra.mxu0 0.0
    %1059 = vmatpush.msra.mxu0 0.0
    %1060 = vmatpush.msra.mxu0 0.0
    %1061 = vmatpush.msra.mxu0 0.0
    %1062 = vmatpush.msra.mxu0 0.0
    %1063 = vmatpush.msra.mxu0 0.0
    %1064 = vmatpush.msra.mxu0 0.0
    %1065 = vmatpush.msra.mxu0 %v1048
    %1066 = vmatpush.msra.mxu0 %v1047
    %1067 = vmatpush.msra.mxu0 %v1046
    %1068 = vmatpush.msra.mxu0 %v1045
    %1069 = vmatmul.f32.gmra.mxu0 %v1051
    %v1070 = vpop.f32.mrf.mxu0
    %v1071 = vadd.f32 %v1049, %v1070
    %1072 = vdwg.mxu0
    %v1073 = vmax.f32 %v1071, 0.0
    %v1074 = vld [vmem:[%s4 + $0x140] sm:$0xf]
    %v1075 = vld [vmem:[%s4 + $0x144] sm:$0xf]
    %v1076 = vld [vmem:[%s4 + $0x148] sm:$0xf]
    %v1077 = vld [vmem:[%s4 + $0x14c] sm:$0xf]
    %v1078 = vunpack.c.l.bf16 %v1074
    %v1079 = vunpack.c.l.bf16 %v1075
    %v1080 = vunpack.c.l.bf16 %v1076
    %v1081 = vunpack.c.l.bf16 %v1077
    %v1082 = vld [vmem:[#allocation2 + $0x86] ss:$0 sm:$0xff]
    %v1084 = vsel %vm951, %v1073, 0
    %1086 = vmatpush.msra.mxu0 0.0
    %1087 = vmatpush.msra.mxu0 0.0
    %1088 = vmatpush.msra.mxu0 0.0
    %1089 = vmatpush.msra.mxu0 0.0
    %1090 = vmatpush.msra.mxu0 0.0
    %1091 = vmatpush.msra.mxu0 0.0
    %1092 = vmatpush.msra.mxu0 0.0
    %1093 = vmatpush.msra.mxu0 0.0
    %1094 = vmatpush.msra.mxu0 0.0
    %1095 = vmatpush.msra.mxu0 0.0
    %1096 = vmatpush.msra.mxu0 0.0
    %1097 = vmatpush.msra.mxu0 0.0
    %1098 = vmatpush.msra.mxu0 %v1081
    %1099 = vmatpush.msra.mxu0 %v1080
    %1100 = vmatpush.msra.mxu0 %v1079
    %1101 = vmatpush.msra.mxu0 %v1078
    %1102 = vmatmul.f32.gmra.mxu0 %v1084
    %v1103 = vpop.f32.mrf.mxu0
    %v1104 = vadd.f32 %v1082, %v1103
    %1105 = vdwg.mxu0
    %v1106 = vld [vmem:[%s4 + $0xa0] sm:$0xf]
    %v1107 = vld [vmem:[%s4 + $0xa4] sm:$0xf]
    %v1108 = vld [vmem:[%s4 + $0xa8] sm:$0xf]
    %v1109 = vld [vmem:[%s4 + $0xac] sm:$0xf]
    %v1110 = vunpack.c.l.bf16 %v1106
    %v1111 = vunpack.c.l.bf16 %v1107
    %v1112 = vunpack.c.l.bf16 %v1108
    %v1113 = vunpack.c.l.bf16 %v1109
    %v1114 = vld [vmem:[#allocation2 + $0x67] ss:$0 sm:$0xff]
    %v1116 = vsel %vm951, %v908, 0
    %1118 = vmatpush.msra.mxu0 0.0
    %1119 = vmatpush.msra.mxu0 0.0
    %1120 = vmatpush.msra.mxu0 0.0
    %1121 = vmatpush.msra.mxu0 0.0
    %1122 = vmatpush.msra.mxu0 0.0
    %1123 = vmatpush.msra.mxu0 0.0
    %1124 = vmatpush.msra.mxu0 0.0
    %1125 = vmatpush.msra.mxu0 0.0
    %1126 = vmatpush.msra.mxu0 0.0
    %1127 = vmatpush.msra.mxu0 0.0
    %1128 = vmatpush.msra.mxu0 0.0
    %1129 = vmatpush.msra.mxu0 0.0
    %1130 = vmatpush.msra.mxu0 %v1113
    %1131 = vmatpush.msra.mxu0 %v1112
    %1132 = vmatpush.msra.mxu0 %v1111
    %1133 = vmatpush.msra.mxu0 %v1110
    %1134 = vmatmul.f32.gmra.mxu0 %v1116
    %v1135 = vpop.f32.mrf.mxu0
    %v1136 = vadd.f32 %v1114, %v1135
    %1137 = vdwg.mxu0
    %vm1138 = vcmp.gt.f32.partialorder %v1136, 20.0
    %v1139 = vmin.f32 %v1136, 20.0
    %v1140 = vmul.f32 %v1139, 1.442695
    %v1141 = vpow.pop %v1140
    %v1142 = vadd.f32 %v1141, 1.0
    %v1143 = vlog2.pop %v1142
    %v1144 = vmul.f32 %v1143, 0.6931472
    %v1145 = vsel %vm1138, %v1136, %v1144
    %v1146 = vld [vmem:[#allocation4] sm:$0xff]
    %v1147 = vld [vmem:[#allocation4 + $0x8] sm:$0xff]
    %v1148 = vld [vmem:[#allocation4 + $0x10] sm:$0xff]
    %v1149 = vld [vmem:[#allocation4 + $0x18] sm:$0xff]
    %v1150 = vld [vmem:[#allocation4 + $0x20] sm:$0xff]
    %v1151 = vld [vmem:[#allocation4 + $0x28] sm:$0xff]
    %v1152 = vld [vmem:[#allocation4 + $0x30] sm:$0xff]
    %v1153 = vld [vmem:[#allocation4 + $0x38] sm:$0xff]
    %v1154 = vld [vmem:[#allocation4 + $0x40] sm:$0xff]
    %v1155 = vld [vmem:[#allocation4 + $0x48] sm:$0xff]
    %v1156 = vld [vmem:[#allocation4 + $0x50] sm:$0xff]
    %v1157 = vld [vmem:[#allocation4 + $0x58] sm:$0xff]
    %v1158 = vld [vmem:[#allocation4 + $0x60] sm:$0xff]
    %v1159 = vld [vmem:[#allocation4 + $0x68] sm:$0xff]
    %v1160 = vld [vmem:[#allocation4 + $0x70] sm:$0xff]
    %v1161 = vld [vmem:[#allocation4 + $0x78] sm:$0xff]
    %v1162 = vunpack.c.l.bf16 %v1146
    %v1163 = vunpack.c.h.bf16 %v1146
    %v1164 = vunpack.c.l.bf16 %v1147
    %v1165 = vunpack.c.h.bf16 %v1147
    %v1166 = vunpack.c.l.bf16 %v1148
    %v1167 = vunpack.c.h.bf16 %v1148
    %v1168 = vunpack.c.l.bf16 %v1149
    %v1169 = vunpack.c.h.bf16 %v1149
    %v1170 = vunpack.c.l.bf16 %v1150
    %v1171 = vunpack.c.h.bf16 %v1150
    %v1172 = vunpack.c.l.bf16 %v1151
    %v1173 = vunpack.c.h.bf16 %v1151
    %v1174 = vunpack.c.l.bf16 %v1152
    %v1175 = vunpack.c.h.bf16 %v1152
    %v1176 = vunpack.c.l.bf16 %v1153
    %v1177 = vunpack.c.h.bf16 %v1153
    %v1178 = vunpack.c.l.bf16 %v1154
    %v1179 = vunpack.c.h.bf16 %v1154
    %v1180 = vunpack.c.l.bf16 %v1155
    %v1181 = vunpack.c.h.bf16 %v1155
    %v1182 = vunpack.c.l.bf16 %v1156
    %v1183 = vunpack.c.h.bf16 %v1156
    %v1184 = vunpack.c.l.bf16 %v1157
    %v1185 = vunpack.c.h.bf16 %v1157
    %v1186 = vunpack.c.l.bf16 %v1158
    %v1187 = vunpack.c.h.bf16 %v1158
    %v1188 = vunpack.c.l.bf16 %v1159
    %v1189 = vunpack.c.h.bf16 %v1159
    %v1190 = vunpack.c.l.bf16 %v1160
    %v1191 = vunpack.c.h.bf16 %v1160
    %v1192 = vunpack.c.l.bf16 %v1161
    %v1193 = vunpack.c.h.bf16 %v1161
    %s1194 = scalar_lea.vmem [#allocation2], 128
    %v1195 = vld [vmem:[%s1194] ss:$8 sm:$0xf]
    %v1197 = vperm.slane %v1195, 0
    %v1198 = vperm.slane %v1195, 1
    %v1199 = vperm.slane %v1195, 2
    %v1200 = vperm.slane %v1195, 3
    %v1206 = vsel %vm886, %v1145, 0
    %1208 = vmatpush.msra.mxu0 0.0
    %1209 = vmatpush.msra.mxu0 0.0
    %1210 = vmatpush.msra.mxu0 0.0
    %1211 = vmatpush.msra.mxu0 0.0
    %1212 = vmatpush.msra.mxu0 0.0
    %1213 = vmatpush.msra.mxu0 0.0
    %1214 = vmatpush.msra.mxu0 0.0
    %1215 = vmatpush.msra.mxu0 0.0
    %1216 = vmatpush.msra.mxu0 %v1190
    %1217 = vmatpush.msra.mxu0 %v1186
    %1218 = vmatpush.msra.mxu0 %v1182
    %1219 = vmatpush.msra.mxu0 %v1178
    %1220 = vmatpush.msra.mxu0 %v1174
    %1221 = vmatpush.msra.mxu0 %v1170
    %1222 = vmatpush.msra.mxu0 %v1166
    %1223 = vmatpush.msra.mxu0 %v1162
    %1224 = vmatmul.f32.gmra.mxu0 %v1206
    %v1225 = vpop.f32.mrf.mxu0
    %v1226 = vadd.f32 %v1197, %v1225
    %1227 = vdwg.mxu0
    %1228 = vmatpush.msra.mxu0 0.0
    %1229 = vmatpush.msra.mxu0 0.0
    %1230 = vmatpush.msra.mxu0 0.0
    %1231 = vmatpush.msra.mxu0 0.0
    %1232 = vmatpush.msra.mxu0 0.0
    %1233 = vmatpush.msra.mxu0 0.0
    %1234 = vmatpush.msra.mxu0 0.0
    %1235 = vmatpush.msra.mxu0 0.0
    %1236 = vmatpush.msra.mxu0 %v1191
    %1237 = vmatpush.msra.mxu0 %v1187
    %1238 = vmatpush.msra.mxu0 %v1183
    %1239 = vmatpush.msra.mxu0 %v1179
    %1240 = vmatpush.msra.mxu0 %v1175
    %1241 = vmatpush.msra.mxu0 %v1171
    %1242 = vmatpush.msra.mxu0 %v1167
    %1243 = vmatpush.msra.mxu0 %v1163
    %1244 = vmatmul.f32.gmra.mxu0 %v1206
    %v1245 = vpop.f32.mrf.mxu0
    %v1246 = vadd.f32 %v1198, %v1245
    %1247 = vdwg.mxu0
    %1248 = vmatpush.msra.mxu0 0.0
    %1249 = vmatpush.msra.mxu0 0.0
    %1250 = vmatpush.msra.mxu0 0.0
    %1251 = vmatpush.msra.mxu0 0.0
    %1252 = vmatpush.msra.mxu0 0.0
    %1253 = vmatpush.msra.mxu0 0.0
    %1254 = vmatpush.msra.mxu0 0.0
    %1255 = vmatpush.msra.mxu0 0.0
    %1256 = vmatpush.msra.mxu0 %v1192
    %1257 = vmatpush.msra.mxu0 %v1188
    %1258 = vmatpush.msra.mxu0 %v1184
    %1259 = vmatpush.msra.mxu0 %v1180
    %1260 = vmatpush.msra.mxu0 %v1176
    %1261 = vmatpush.msra.mxu0 %v1172
    %1262 = vmatpush.msra.mxu0 %v1168
    %1263 = vmatpush.msra.mxu0 %v1164
    %1264 = vmatmul.f32.gmra.mxu0 %v1206
    %v1265 = vpop.f32.mrf.mxu0
    %v1266 = vadd.f32 %v1199, %v1265
    %1267 = vdwg.mxu0
    %1268 = vmatpush.msra.mxu0 0.0
    %1269 = vmatpush.msra.mxu0 0.0
    %1270 = vmatpush.msra.mxu0 0.0
    %1271 = vmatpush.msra.mxu0 0.0
    %1272 = vmatpush.msra.mxu0 0.0
    %1273 = vmatpush.msra.mxu0 0.0
    %1274 = vmatpush.msra.mxu0 0.0
    %1275 = vmatpush.msra.mxu0 0.0
    %1276 = vmatpush.msra.mxu0 %v1193
    %1277 = vmatpush.msra.mxu0 %v1189
    %1278 = vmatpush.msra.mxu0 %v1185
    %1279 = vmatpush.msra.mxu0 %v1181
    %1280 = vmatpush.msra.mxu0 %v1177
    %1281 = vmatpush.msra.mxu0 %v1173
    %1282 = vmatpush.msra.mxu0 %v1169
    %1283 = vmatpush.msra.mxu0 %v1165
    %1284 = vmatmul.f32.gmra.mxu0 %v1206
    %v1285 = vpop.f32.mrf.mxu0
    %v1286 = vadd.f32 %v1200, %v1285
    %1287 = vdwg.mxu0
    %v1288 = vld [vmem:[%s4 + $0x120] sm:$0xf]
    %v1289 = vld [vmem:[%s4 + $0x124] sm:$0xf]
    %v1290 = vld [vmem:[%s4 + $0x128] sm:$0xf]
    %v1291 = vld [vmem:[%s4 + $0x12c] sm:$0xf]
    %v1292 = vunpack.c.l.bf16 %v1288
    %v1293 = vunpack.c.l.bf16 %v1289
    %v1294 = vunpack.c.l.bf16 %v1290
    %v1295 = vunpack.c.l.bf16 %v1291
    %v1296 = vld [vmem:[#allocation2 + $0x83] ss:$0 sm:$0xff]
    %v1297 = vsel %vm951, %v1034, 0
    %1299 = vmatpush.msra.mxu0 0.0
    %1300 = vmatpush.msra.mxu0 0.0
    %1301 = vmatpush.msra.mxu0 0.0
    %1302 = vmatpush.msra.mxu0 0.0
    %1303 = vmatpush.msra.mxu0 0.0
    %1304 = vmatpush.msra.mxu0 0.0
    %1305 = vmatpush.msra.mxu0 0.0
    %1306 = vmatpush.msra.mxu0 0.0
    %1307 = vmatpush.msra.mxu0 0.0
    %1308 = vmatpush.msra.mxu0 0.0
    %1309 = vmatpush.msra.mxu0 0.0
    %1310 = vmatpush.msra.mxu0 0.0
    %1311 = vmatpush.msra.mxu0 %v1295
    %1312 = vmatpush.msra.mxu0 %v1294
    %1313 = vmatpush.msra.mxu0 %v1293
    %1314 = vmatpush.msra.mxu0 %v1292
    %1315 = vmatmul.f32.gmra.mxu0 %v1297
    %v1316 = vpop.f32.mrf.mxu0
    %v1317 = vadd.f32 %v1296, %v1316
    %1318 = vdwg.mxu0
    %vm1319 = vcmp.gt.f32.partialorder %v1317, 20.0
    %v1320 = vmin.f32 %v1317, 20.0
    %v1321 = vmul.f32 %v1320, 1.442695
    %v1322 = vpow.pop %v1321
    %v1323 = vadd.f32 %v1322, 1.0
    %v1324 = vlog2.pop %v1323
    %v1325 = vmul.f32 %v1324, 0.6931472
    %v1326 = vsel %vm1319, %v1317, %v1325
    %v1327 = vld [vmem:[#allocation4 + $0x80] sm:$0xff]
    %v1328 = vld [vmem:[#allocation4 + $0x90] sm:$0xff]
    %v1329 = vld [vmem:[#allocation4 + $0xa0] sm:$0xff]
    %v1330 = vld [vmem:[#allocation4 + $0xb0] sm:$0xff]
    %v1331 = vld [vmem:[#allocation4 + $0xc0] sm:$0xff]
    %v1332 = vld [vmem:[#allocation4 + $0xd0] sm:$0xff]
    %v1333 = vld [vmem:[#allocation4 + $0xe0] sm:$0xff]
    %v1334 = vld [vmem:[#allocation4 + $0xf0] sm:$0xff]
    %v1335 = vunpack.c.l.bf16 %v1327
    %v1336 = vunpack.c.h.bf16 %v1327
    %v1337 = vunpack.c.l.bf16 %v1328
    %v1338 = vunpack.c.h.bf16 %v1328
    %v1339 = vunpack.c.l.bf16 %v1329
    %v1340 = vunpack.c.h.bf16 %v1329
    %v1341 = vunpack.c.l.bf16 %v1330
    %v1342 = vunpack.c.h.bf16 %v1330
    %v1343 = vunpack.c.l.bf16 %v1331
    %v1344 = vunpack.c.h.bf16 %v1331
    %v1345 = vunpack.c.l.bf16 %v1332
    %v1346 = vunpack.c.h.bf16 %v1332
    %v1347 = vunpack.c.l.bf16 %v1333
    %v1348 = vunpack.c.h.bf16 %v1333
    %v1349 = vunpack.c.l.bf16 %v1334
    %v1350 = vunpack.c.h.bf16 %v1334
    %s1351 = scalar_lea.vmem [#allocation2], 132
    %v1352 = vld [vmem:[%s1351] ss:$8 sm:$0x3]
    %v1354 = vperm.slane %v1352, 0
    %v1355 = vperm.slane %v1352, 1
    %v1359 = vsel %vm886, %v1326, 0
    %1361 = vmatpush.msra.mxu0 0.0
    %1362 = vmatpush.msra.mxu0 0.0
    %1363 = vmatpush.msra.mxu0 0.0
    %1364 = vmatpush.msra.mxu0 0.0
    %1365 = vmatpush.msra.mxu0 0.0
    %1366 = vmatpush.msra.mxu0 0.0
    %1367 = vmatpush.msra.mxu0 0.0
    %1368 = vmatpush.msra.mxu0 0.0
    %1369 = vmatpush.msra.mxu0 %v1349
    %1370 = vmatpush.msra.mxu0 %v1347
    %1371 = vmatpush.msra.mxu0 %v1345
    %1372 = vmatpush.msra.mxu0 %v1343
    %1373 = vmatpush.msra.mxu0 %v1341
    %1374 = vmatpush.msra.mxu0 %v1339
    %1375 = vmatpush.msra.mxu0 %v1337
    %1376 = vmatpush.msra.mxu0 %v1335
    %1377 = vmatmul.f32.gmra.mxu0 %v1359
    %v1378 = vpop.f32.mrf.mxu0
    %v1379 = vadd.f32 %v1354, %v1378
    %1380 = vdwg.mxu0
    %1381 = vmatpush.msra.mxu0 0.0
    %1382 = vmatpush.msra.mxu0 0.0
    %1383 = vmatpush.msra.mxu0 0.0
    %1384 = vmatpush.msra.mxu0 0.0
    %1385 = vmatpush.msra.mxu0 0.0
    %1386 = vmatpush.msra.mxu0 0.0
    %1387 = vmatpush.msra.mxu0 0.0
    %1388 = vmatpush.msra.mxu0 0.0
    %1389 = vmatpush.msra.mxu0 %v1350
    %1390 = vmatpush.msra.mxu0 %v1348
    %1391 = vmatpush.msra.mxu0 %v1346
    %1392 = vmatpush.msra.mxu0 %v1344
    %1393 = vmatpush.msra.mxu0 %v1342
    %1394 = vmatpush.msra.mxu0 %v1340
    %1395 = vmatpush.msra.mxu0 %v1338
    %1396 = vmatpush.msra.mxu0 %v1336
    %1397 = vmatmul.f32.gmra.mxu0 %v1359
    %v1398 = vpop.f32.mrf.mxu0
    %v1399 = vadd.f32 %v1355, %v1398
    %1400 = vdwg.mxu0
    %1401 = vst [vmem:[%s6] sm:$0xff] 0.0
    %1402 = vst [vmem:[%s6 + $0x8] sm:$0xff] 0.0
    %1403 = vst [vmem:[%s6 + $0x10] sm:$0xff] 0.0
    %1404 = vst [vmem:[%s6 + $0x18] sm:$0xff] 0.0
    %1405 = vst [vmem:[%s6] sm:$0x3] %v1226
    %1406 = vst [vmem:[%s6 + $0x8] sm:$0x3] %v1246
    %1407 = vst [vmem:[%s6 + $0x10] sm:$0x3] %v1266
    %vm1408 = vcmask 779264
    %1409 = vst.msk [vmem:[%s6 + $0x18] sm:$0x3] %vm1408, %v1286
    %v1412 = vrot.slane %v1379, 6
    %v1413 = vrot.slane %v1399, 6
    %1416 = vst [vmem:[%s6] sm:$0xc] %v1412
    %vm1417 = vcmask 257026
    %1418 = vst.msk [vmem:[%s6 + $0x8] sm:$0xc] %vm1417, %v1413
    %v1420 = vrot.slane %v1104, 4
    %vm1422 = vcmask 130052
    %1423 = vst.msk [vmem:[%s6] sm:$0xf0] %vm1422, %v1420
    // Predicated region
    $region34: #{_lambda_.1} parent=1 // pred_check
      _
    $region35: #{_lambda_.1} parent=1 // pred_check_branch
      %1425 = sbr.rel (0) target = $region37
    $region36: #{_lambda_.1} parent=1 // pred_region
      _
    $region37: #{_lambda_.1} parent=1 // pred_fallthru
      _
    // Predicated region
    $region38: #{_lambda_.1} parent=1 // pred_check
      _
    $region39: #{_lambda_.1} parent=1 // pred_check_branch
      %1427 = sbr.rel (0) target = $region41
    $region40: #{_lambda_.1} parent=1 // pred_region
      _
    $region41: #{_lambda_.1} parent=1 // pred_fallthru
      _
    %1428 = vsyncpa [#allocation3], 1
    %1429 = vsyncpa [#allocation5], 1

</llo_original>
